<compile_context>
chip_gen: v7x
topology: tpu7x:2x2x1
jax: 0.10.0
libtpu: 0.0.40
codegen_flags: <defaults>
</compile_context>

<pallas_src>
import functools

import jax
import jax.numpy as jnp
from jax import lax
from jax.experimental import pallas as pl
from jax.experimental.pallas import tpu as pltpu

IN_F = 512
HID_F = 128
OUT_F = 28  # fc2 out-features (weight only returned, never applied in forward)

_SMALL_BATCH_THRESHOLD = 512  # below this, a fused XLA matmul beats a custom call


def _round_up(n, m):
    return ((n + m - 1) // m) * m


def _fc1_kernel(x_ref, w_ref, b_ref, o_ref, *, precision):
    # x_ref: (TB, 512)   VMEM  (f32 or bf16) — streamed per grid step
    # w_ref: (512, 128)  VMEM  (K, N) MXU-native layout — grid-invariant
    # b_ref: (1, 128)    VMEM  f32 — grid-invariant
    # o_ref: (TB, 128)   VMEM  output dtype (f32 or bf16)
    acc = jnp.dot(
        x_ref[...], w_ref[...],
        preferred_element_type=jnp.float32,
        precision=precision,
    )
    o_ref[...] = (acc + b_ref[...]).astype(o_ref.dtype)


def fc1_forward(x, w1, b1, *, tile_b=2048, out_dtype=None,
                small_batch_fallback=True):
    """Compute x @ w1.T + b1 (fc1 of Prototype) with a Pallas TPU kernel.

    x:  [B, 512]  float32 or bfloat16 (dtype is respected; never re-cast here)
    w1: [128, 512] PyTorch nn.Linear weight layout (transposed once, wrapper-side)
    b1: [128]
    """
    B, in_f = x.shape
    assert in_f == IN_F
    assert w1.shape == (HID_F, IN_F)
    assert b1.shape == (HID_F,)

    if out_dtype is None:
        out_dtype = x.dtype
    out_dtype = jnp.dtype(out_dtype)

    f32_inputs = (x.dtype == jnp.float32)
    precision = lax.Precision.HIGHEST if f32_inputs else lax.Precision.DEFAULT

    # Tiny batches: skip the custom call entirely; XLA fuses this.
    if small_batch_fallback and B < _SMALL_BATCH_THRESHOLD:
        acc = jnp.dot(x, jnp.transpose(w1).astype(x.dtype),
                      preferred_element_type=jnp.float32,
                      precision=precision)
        return (acc + b1.astype(jnp.float32)).astype(out_dtype)

    # One-time (K, N) weight layout + dtype match with x (256 KiB, negligible).
    w_kn = jnp.transpose(w1).astype(x.dtype)          # (512, 128)
    b2d = b1.reshape(1, HID_F).astype(jnp.float32)    # (1, 128)

    # Row tile: multiple of the dtype's sublane packing (8 for f32, 16 for bf16),
    # clamped for small/ragged batches. Partial last block is masked by Pallas,
    # so any B is supported while keeping the big tile for large B.
    sublane = 16 if x.dtype == jnp.bfloat16 else 8
    tb = int(min(tile_b, _round_up(B, sublane)))
    tb = max(_round_up(tb, sublane), sublane)
    grid = (pl.cdiv(B, tb),)

    # Explicit VMEM budget: double-buffered x tile + out tile + (small) weight/bias.
    need = (2 * tb * IN_F * x.dtype.itemsize
            + 2 * tb * HID_F * out_dtype.itemsize
            + 2 * w_kn.size * w_kn.dtype.itemsize
            + 2 * b2d.size * 4)
    vmem_limit = int(min(max(need + (8 << 20), 24 << 20), 64 << 20))

    bytes_accessed = (
        x.size * x.dtype.itemsize
        + w_kn.size * w_kn.dtype.itemsize
        + b2d.size * 4
        + B * HID_F * out_dtype.itemsize
    )
    cost = pl.CostEstimate(
        flops=2 * B * IN_F * HID_F,
        transcendentals=0,
        bytes_accessed=bytes_accessed,
    )

    kernel = functools.partial(_fc1_kernel, precision=precision)

    out = pl.pallas_call(
        kernel,
        out_shape=jax.ShapeDtypeStruct((B, HID_F), out_dtype),
        grid_spec=pltpu.PrefetchScalarGridSpec(
            num_scalar_prefetch=0,
            grid=grid,
            in_specs=[
                pl.BlockSpec((tb, IN_F), lambda i: (i, 0)),      # x tile (streams)
                pl.BlockSpec((IN_F, HID_F), lambda i: (0, 0)),   # W (K,N), grid-invariant
                pl.BlockSpec((1, HID_F), lambda i: (0, 0)),      # bias, grid-invariant
            ],
            out_specs=pl.BlockSpec((tb, HID_F), lambda i: (i, 0)),
        ),
        compiler_params=pltpu.CompilerParams(
            dimension_semantics=("parallel",),
            vmem_limit_bytes=vmem_limit,
        ),
        cost_estimate=cost,
    )(x, w_kn, b2d)
    return out


def init_prototype_params(key):
    """Deterministic, in-script parameter init matching nn.Linear shapes."""
    k1, k2, k3 = jax.random.split(key, 3)
    bound1 = 1.0 / jnp.sqrt(jnp.float32(IN_F))
    w1 = jax.random.uniform(k1, (HID_F, IN_F), jnp.float32, -bound1, bound1)
    b1 = jax.random.uniform(k2, (HID_F,), jnp.float32, -bound1, bound1)
    bound2 = 1.0 / jnp.sqrt(jnp.float32(HID_F))
    w2 = jax.random.uniform(k3, (OUT_F, HID_F), jnp.float32, -bound2, bound2)
    return w1, b1, w2


def prototype_forward(x, w1, b1, w2, *, tile_b=2048, out_dtype=None,
                      small_batch_fallback=True):
    """Mirrors Prototype.forward: returns (out, fc1_params, fc2_params)."""
    out = fc1_forward(x, w1, b1, tile_b=tile_b, out_dtype=out_dtype,
                      small_batch_fallback=small_batch_fallback)
    fc_w1 = [w1, b1]   # fc1 parameters (weight, bias) — PyTorch layout
    fc_w2 = [w2]       # fc2 parameters (weight only, no bias) — never applied
    return out, fc_w1, fc_w2


if __name__ == "__main__":
    key = jax.random.PRNGKey(0)
    kx, kp = jax.random.split(key)

    w1, b1, w2 = init_prototype_params(kp)

    # 1) Small batch, f32, Pallas path forced (fallback disabled to exercise the kernel).
    B = 16
    x = jax.random.normal(kx, (B, IN_F), jnp.float32)
    out, fc_w1, fc_w2 = prototype_forward(x, w1, b1, w2, small_batch_fallback=False)
    out = jax.block_until_ready(out)
    ref = x @ w1.T + b1
    assert out.shape == (B, HID_F) and out.dtype == jnp.float32
    assert jnp.allclose(out, ref, atol=1e-4, rtol=1e-4), "f32 mismatch vs reference"
    assert fc_w1[0].shape == (HID_F, IN_F) and fc_w1[1].shape == (HID_F,)
    assert fc_w2[0].shape == (OUT_F, HID_F)

    # 2) Non-tile-aligned batch (partial last block, masked stores) + multiple
    #    grid steps via a small tile_b.
    B2 = 45
    x2 = jax.random.normal(jax.random.PRNGKey(1), (B2, IN_F), jnp.float32)
    out2 = jax.block_until_ready(
        fc1_forward(x2, w1, b1, tile_b=16, small_batch_fallback=False))
    ref2 = x2 @ w1.T + b1
    assert out2.shape == (B2, HID_F)
    assert jnp.allclose(out2, ref2, atol=1e-4, rtol=1e-4), "partial-tile mismatch"

    # 3) bf16-resident input (no wrapper cast): halves HBM bytes for x and out;
    #    f32 accumulation on the MXU; bf16 output by default.
    B3 = 32
    x3 = jax.random.normal(jax.random.PRNGKey(2), (B3, IN_F), jnp.float32)
    x3_bf16 = x3.astype(jnp.bfloat16)          # caller-side bf16 residency
    out3 = jax.block_until_ready(
        fc1_forward(x3_bf16, w1, b1, small_batch_fallback=False))
    assert out3.dtype == jnp.bfloat16
    ref3 = x3_bf16.astype(jnp.float32) @ w1.T + b1
    assert jnp.allclose(out3.astype(jnp.float32), ref3, atol=5e-2, rtol=5e-2), \
        "bf16 path out of tolerance"

    # 4) Small-batch fallback path (plain fused XLA matmul).
    x4 = jax.random.normal(jax.random.PRNGKey(3), (8, IN_F), jnp.float32)
    out4 = jax.block_until_ready(fc1_forward(x4, w1, b1))
    assert jnp.allclose(out4, x4 @ w1.T + b1, atol=1e-4, rtol=1e-4), "fallback mismatch"

    print("KERNEL_OK")
</pallas_src>

<mosaic_0001>
module attributes {stable_mosaic.version = 11 : i64} {
  func.func @_fc1_kernel(%arg0: i32, %arg1: memref<16x512xf32, #tpu.memory_space<vmem>>, %arg2: memref<512x128xf32, #tpu.memory_space<vmem>>, %arg3: memref<1x128xf32, #tpu.memory_space<vmem>>, %arg4: memref<16x128xf32, #tpu.memory_space<vmem>>) attributes {dimension_semantics = [#tpu.dimension_semantics<parallel>], iteration_bounds = array<i64: 1>, scalar_prefetch = 0 : i64, scratch_operands = 0 : i64, tpu.core_type = #tpu.core_type<tc>, window_params = [{transform_indices = @transform_0, window_bounds = array<i64: 16, 512>}, {pipeline_mode = #tpu.pipeline_mode<synchronous>, transform_indices = @transform_1, window_bounds = array<i64: 512, 128>}, {pipeline_mode = #tpu.pipeline_mode<synchronous>, transform_indices = @transform_2, window_bounds = array<i64: 1, 128>}, {transform_indices = @transform_3, window_bounds = array<i64: 16, 128>}]} {
    %c0 = arith.constant 0 : index
    %c0_0 = arith.constant 0 : index
    %0 = vector.load %arg1[%c0, %c0_0] : memref<16x512xf32, #tpu.memory_space<vmem>>, vector<16x512xf32>
    %c0_1 = arith.constant 0 : index
    %c0_2 = arith.constant 0 : index
    %1 = vector.load %arg2[%c0_1, %c0_2] : memref<512x128xf32, #tpu.memory_space<vmem>>, vector<512x128xf32>
    %cst = arith.constant dense<0.000000e+00> : vector<16x128xf32>
    %2 = tpu.matmul %0, %1, %cst {dimension_numbers = #tpu.dot_dimension_numbers<[1], [0], [0], [1], [0, 0, 1, 1], [], []>, precision = #tpu.contract_precision<fp32>} : vector<16x512xf32>, vector<512x128xf32>, vector<16x128xf32> -> vector<16x128xf32>
    %c0_3 = arith.constant 0 : index
    %c0_4 = arith.constant 0 : index
    %3 = vector.load %arg3[%c0_3, %c0_4] : memref<1x128xf32, #tpu.memory_space<vmem>>, vector<1x128xf32>
    %4 = vector.broadcast %3 : vector<1x128xf32> to vector<16x128xf32>
    %5 = arith.addf %2, %4 : vector<16x128xf32>
    %c0_5 = arith.constant 0 : index
    %c0_6 = arith.constant 0 : index
    %6 = vector.load %arg4[%c0_5, %c0_6] : memref<16x128xf32, #tpu.memory_space<vmem>>, vector<16x128xf32>
    tpu.vector_store %arg4[%c0_5, %c0_6], %5 {strides = array<i32>} : memref<16x128xf32, #tpu.memory_space<vmem>>, vector<16x128xf32>,
    return
  }
  func.func @transform_0(%arg0: i32) -> (i32, i32) {
    %c0_i32 = arith.constant 0 : i32
    %c0_i32_0 = arith.constant 0 : i32
    return %arg0, %c0_i32 : i32, i32
  }
  func.func @transform_1(%arg0: i32) -> (i32, i32) {
    %c0_i32 = arith.constant 0 : i32
    %c0_i32_0 = arith.constant 0 : i32
    %c0_i32_1 = arith.constant 0 : i32
    return %c0_i32, %c0_i32_0 : i32, i32
  }
  func.func @transform_2(%arg0: i32) -> (i32, i32) {
    %c0_i32 = arith.constant 0 : i32
    %c0_i32_0 = arith.constant 0 : i32
    %c0_i32_1 = arith.constant 0 : i32
    return %c0_i32, %c0_i32_0 : i32, i32
  }
  func.func @transform_3(%arg0: i32) -> (i32, i32) {
    %c0_i32 = arith.constant 0 : i32
    %c0_i32_0 = arith.constant 0 : i32
    return %arg0, %c0_i32 : i32, i32
  }
}

</mosaic_0001>

<llo_original>
// kernel: tpu_custom_call.1
$region0: #{tpu_custom_call.1}
  #allocation0 [shape = 'u32[]', space=smem, size = 0x4, offset = 0x4, fixed_abs, tag = 'smem constant byte address 0x4 - core index']
  #allocation1 [shape = 'u32[144,128]{1,0:T(1,128)}', space=vmem, size = 0x12000, scoped, tag = 'internal scratch']
  %s0 = inlined_call_operand.hbm [shape: f32[16,512], index: 0, kind: input, shape index: {}]
  %s1 = inlined_call_operand.hbm [shape: f32[512,128], index: 1, kind: input, shape index: {}]
  %s2 = inlined_call_operand.vmem [shape: f32[1,128], index: 2, kind: input, shape index: {}]
  %s3 = inlined_call_operand.hbm [shape: f32[16,128], index: 3, kind: output, shape index: {}]
  %s4 = sld [smem:[#allocation0]]
  $region30: #{tpu_custom_call.1} parent=0
    _
  %s6 = ssub.s32 1, %s4
  %s7 = scalar_select 0, %s6, %s4
  $region1: #{tpu_custom_call.1} parent=0
    #allocation2 [shape = 'u8[32768]{0}', space=vmem, size = 0x8000, scoped, tag = 'input window, operand 0, single buffered']
    #allocation3 [shape = 's32[1]{0}', space=sflag, size = 0x4, scoped, tag = 'scoped memory for tpu_custom_call.1']
    #allocation4 [shape = 's32[1]{0}', space=sflag, size = 0x4, scoped, tag = 'scoped memory for tpu_custom_call.1']
    #allocation5 [shape = 'u8[262144]{0}', space=vmem, size = 0x40000, scoped, tag = 'input window, operand 1, single buffered']
    #allocation6 [shape = 's32[1]{0}', space=sflag, size = 0x4, scoped, tag = 'scoped memory for tpu_custom_call.1']
    #allocation7 [shape = 'u8[8192]{0}', space=vmem, size = 0x2000, scoped, tag = 'output window, operand 0, single buffered']
    %8 = vsyncpa [#allocation3], 0
    %9 = vsyncpa [#allocation6], 0
    %10 = vsyncpa [#allocation4], 0
    // Predicated region
    $region2: #{tpu_custom_call.1} parent=1 // pred_check
      _
    $region3: #{tpu_custom_call.1} parent=1 // pred_check_branch
      %12 = sbr.rel (0) target = $region5
    $region4: #{tpu_custom_call.1} parent=1 // pred_region
      %s14 = ssub.s32 1024, 1024
      %15 = vsyncadd [#allocation3], %s14
      %s16 = sshll.u32 [#allocation2], 4
      %s17 = int_to_ptr.vmem [resolvable:$true] %s16
      %22 = dma.hbm_to_vmem [thread:$0]  %s0, 1024, %s17, [#allocation3], 512, 512, 32
    $region5: #{tpu_custom_call.1} parent=1 // pred_fallthru
      _
    // Predicated region
    $region6: #{tpu_custom_call.1} parent=1 // pred_check
      _
    $region7: #{tpu_custom_call.1} parent=1 // pred_check_branch
      %24 = sbr.rel (0) target = $region9
    $region8: #{tpu_custom_call.1} parent=1 // pred_region
      %s26 = ssub.s32 8192, 8192
      %27 = vsyncadd [#allocation6], %s26
      %s28 = sshll.u32 [#allocation5], 4
      %s29 = int_to_ptr.vmem [resolvable:$true] %s28
      %34 = dma.hbm_to_vmem [thread:$0]  %s1, 8192, %s29, [#allocation6], 128, 128, 8
    $region9: #{tpu_custom_call.1} parent=1 // pred_fallthru
      _
    // Predicated region
    $region10: #{tpu_custom_call.1} parent=1 // pred_check
      _
    $region11: #{tpu_custom_call.1} parent=1 // pred_check_branch
      %36 = sbr.rel (0) target = $region13
    $region12: #{tpu_custom_call.1} parent=1 // pred_region
      _
    $region13: #{tpu_custom_call.1} parent=1 // pred_fallthru
      _
    // Predicated region
    $region14: #{tpu_custom_call.1} parent=1 // pred_check
      _
    $region15: #{tpu_custom_call.1} parent=1 // pred_check_branch
      %38 = sbr.rel (0) target = $region17
    $region16: #{tpu_custom_call.1} parent=1 // pred_region
      %39 = dma.done [#allocation3], 1024
    $region17: #{tpu_custom_call.1} parent=1 // pred_fallthru
      _
    // Predicated region
    $region18: #{tpu_custom_call.1} parent=1 // pred_check
      _
    $region19: #{tpu_custom_call.1} parent=1 // pred_check_branch
      %41 = sbr.rel (0) target = $region21
    $region20: #{tpu_custom_call.1} parent=1 // pred_region
      %42 = dma.done [#allocation6], 8192
    $region21: #{tpu_custom_call.1} parent=1 // pred_fallthru
      _
    %v43 = vld [vmem:[#allocation2] sm:$0xff]
    %v44 = vld [vmem:[#allocation2 + $0x8] sm:$0xff]
    %v45 = vld [vmem:[#allocation2 + $0x10] sm:$0xff]
    %v46 = vld [vmem:[#allocation2 + $0x18] sm:$0xff]
    %v47 = vld [vmem:[#allocation2 + $0x20] sm:$0xff]
    %v48 = vld [vmem:[#allocation2 + $0x28] sm:$0xff]
    %v49 = vld [vmem:[#allocation2 + $0x30] sm:$0xff]
    %v50 = vld [vmem:[#allocation2 + $0x38] sm:$0xff]
    %v51 = vld [vmem:[#allocation5] sm:$0xff]
    %v52 = vld [vmem:[#allocation5 + $0x8] sm:$0xff]
    %v53 = vld [vmem:[#allocation5 + $0x10] sm:$0xff]
    %v54 = vld [vmem:[#allocation5 + $0x18] sm:$0xff]
    %v55 = vld [vmem:[#allocation5 + $0x20] sm:$0xff]
    %v56 = vld [vmem:[#allocation5 + $0x28] sm:$0xff]
    %v57 = vld [vmem:[#allocation5 + $0x30] sm:$0xff]
    %v58 = vld [vmem:[#allocation5 + $0x38] sm:$0xff]
    %v59 = vld [vmem:[#allocation5 + $0x40] sm:$0xff]
    %v60 = vld [vmem:[#allocation5 + $0x48] sm:$0xff]
    %v61 = vld [vmem:[#allocation5 + $0x50] sm:$0xff]
    %v62 = vld [vmem:[#allocation5 + $0x58] sm:$0xff]
    %v63 = vld [vmem:[#allocation5 + $0x60] sm:$0xff]
    %v64 = vld [vmem:[#allocation5 + $0x68] sm:$0xff]
    %v65 = vld [vmem:[#allocation5 + $0x70] sm:$0xff]
    %v66 = vld [vmem:[#allocation5 + $0x78] sm:$0xff]
    %v67 = vld [vmem:[#allocation5 + $0x80] sm:$0xff]
    %v68 = vld [vmem:[#allocation5 + $0x88] sm:$0xff]
    %v69 = vld [vmem:[#allocation5 + $0x90] sm:$0xff]
    %v70 = vld [vmem:[#allocation5 + $0x98] sm:$0xff]
    %v71 = vld [vmem:[#allocation5 + $0xa0] sm:$0xff]
    %v72 = vld [vmem:[#allocation5 + $0xa8] sm:$0xff]
    %v73 = vld [vmem:[#allocation5 + $0xb0] sm:$0xff]
    %v74 = vld [vmem:[#allocation5 + $0xb8] sm:$0xff]
    %v75 = vld [vmem:[#allocation5 + $0xc0] sm:$0xff]
    %v76 = vld [vmem:[#allocation5 + $0xc8] sm:$0xff]
    %v77 = vld [vmem:[#allocation5 + $0xd0] sm:$0xff]
    %v78 = vld [vmem:[#allocation5 + $0xd8] sm:$0xff]
    %v79 = vld [vmem:[#allocation5 + $0xe0] sm:$0xff]
    %v80 = vld [vmem:[#allocation5 + $0xe8] sm:$0xff]
    %v81 = vld [vmem:[#allocation5 + $0xf0] sm:$0xff]
    %v82 = vld [vmem:[#allocation5 + $0xf8] sm:$0xff]
    %v83 = vld [vmem:[#allocation5 + $0x100] sm:$0xff]
    %v84 = vld [vmem:[#allocation5 + $0x108] sm:$0xff]
    %v85 = vld [vmem:[#allocation5 + $0x110] sm:$0xff]
    %v86 = vld [vmem:[#allocation5 + $0x118] sm:$0xff]
    %v87 = vld [vmem:[#allocation5 + $0x120] sm:$0xff]
    %v88 = vld [vmem:[#allocation5 + $0x128] sm:$0xff]
    %v89 = vld [vmem:[#allocation5 + $0x130] sm:$0xff]
    %v90 = vld [vmem:[#allocation5 + $0x138] sm:$0xff]
    %v91 = vld [vmem:[#allocation5 + $0x140] sm:$0xff]
    %v92 = vld [vmem:[#allocation5 + $0x148] sm:$0xff]
    %v93 = vld [vmem:[#allocation5 + $0x150] sm:$0xff]
    %v94 = vld [vmem:[#allocation5 + $0x158] sm:$0xff]
    %v95 = vld [vmem:[#allocation5 + $0x160] sm:$0xff]
    %v96 = vld [vmem:[#allocation5 + $0x168] sm:$0xff]
    %v97 = vld [vmem:[#allocation5 + $0x170] sm:$0xff]
    %v98 = vld [vmem:[#allocation5 + $0x178] sm:$0xff]
    %v99 = vld [vmem:[#allocation5 + $0x180] sm:$0xff]
    %v100 = vld [vmem:[#allocation5 + $0x188] sm:$0xff]
    %v101 = vld [vmem:[#allocation5 + $0x190] sm:$0xff]
    %v102 = vld [vmem:[#allocation5 + $0x198] sm:$0xff]
    %v103 = vld [vmem:[#allocation5 + $0x1a0] sm:$0xff]
    %v104 = vld [vmem:[#allocation5 + $0x1a8] sm:$0xff]
    %v105 = vld [vmem:[#allocation5 + $0x1b0] sm:$0xff]
    %v106 = vld [vmem:[#allocation5 + $0x1b8] sm:$0xff]
    %v107 = vld [vmem:[#allocation5 + $0x1c0] sm:$0xff]
    %v108 = vld [vmem:[#allocation5 + $0x1c8] sm:$0xff]
    %v109 = vld [vmem:[#allocation5 + $0x1d0] sm:$0xff]
    %v110 = vld [vmem:[#allocation5 + $0x1d8] sm:$0xff]
    %v111 = vld [vmem:[#allocation5 + $0x1e0] sm:$0xff]
    %v112 = vld [vmem:[#allocation5 + $0x1e8] sm:$0xff]
    %v113 = vld [vmem:[#allocation5 + $0x1f0] sm:$0xff]
    %v114 = vld [vmem:[#allocation5 + $0x1f8] sm:$0xff]
    %v115 = vld [vmem:[%s2] sm:$0x1]
    %v117 = vlaneseq
    %v118 = vshrl.u32 %v117, 7
    %v119 = vsub.s32 0, %v118
    %v120 = vrot.slane %v115, %v119
    %122 = vmatprep.subr.mxu0 0.0
    %v123 = vand.u32 %v51, 4294901760
    %124 = vmatpush1.msra.mxu0 %v123
    %125 = vmatprep.subr.mxu0 0.0
    %v126 = vand.u32 %v52, 4294901760
    %127 = vmatpush1.msra.mxu0 %v126
    %128 = vmatprep.subr.mxu0 0.0
    %v129 = vand.u32 %v53, 4294901760
    %130 = vmatpush1.msra.mxu0 %v129
    %131 = vmatprep.subr.mxu0 0.0
    %v132 = vand.u32 %v54, 4294901760
    %133 = vmatpush1.msra.mxu0 %v132
    %134 = vmatprep.subr.mxu0 0.0
    %v135 = vand.u32 %v55, 4294901760
    %136 = vmatpush1.msra.mxu0 %v135
    %137 = vmatprep.subr.mxu0 0.0
    %v138 = vand.u32 %v56, 4294901760
    %139 = vmatpush1.msra.mxu0 %v138
    %140 = vmatprep.subr.mxu0 0.0
    %v141 = vand.u32 %v57, 4294901760
    %142 = vmatpush1.msra.mxu0 %v141
    %143 = vmatprep.subr.mxu0 0.0
    %v144 = vand.u32 %v58, 4294901760
    %145 = vmatpush1.msra.mxu0 %v144
    %146 = vmatprep.subr.mxu0 0.0
    %v147 = vand.u32 %v59, 4294901760
    %148 = vmatpush1.msra.mxu0 %v147
    %149 = vmatprep.subr.mxu0 0.0
    %v150 = vand.u32 %v60, 4294901760
    %151 = vmatpush1.msra.mxu0 %v150
    %152 = vmatprep.subr.mxu0 0.0
    %v153 = vand.u32 %v61, 4294901760
    %154 = vmatpush1.msra.mxu0 %v153
    %155 = vmatprep.subr.mxu0 0.0
    %v156 = vand.u32 %v62, 4294901760
    %157 = vmatpush1.msra.mxu0 %v156
    %158 = vmatprep.subr.mxu0 0.0
    %v159 = vand.u32 %v63, 4294901760
    %160 = vmatpush1.msra.mxu0 %v159
    %161 = vmatprep.subr.mxu0 0.0
    %v162 = vand.u32 %v64, 4294901760
    %163 = vmatpush1.msra.mxu0 %v162
    %164 = vmatprep.subr.mxu0 0.0
    %v165 = vand.u32 %v65, 4294901760
    %166 = vmatpush1.msra.mxu0 %v165
    %167 = vmatprep.subr.mxu0 0.0
    %v168 = vand.u32 %v66, 4294901760
    %169 = vmatpush1.msra.mxu0 %v168
    %170 = vmatprep.subr.mxu0 0.0
    %v171 = vand.u32 %v67, 4294901760
    %172 = vmatpush1.msra.mxu0 %v171
    %173 = vmatprep.subr.mxu0 0.0
    %v174 = vand.u32 %v68, 4294901760
    %175 = vmatpush1.msra.mxu0 %v174
    %176 = vmatprep.subr.mxu0 0.0
    %v177 = vand.u32 %v69, 4294901760
    %178 = vmatpush1.msra.mxu0 %v177
    %179 = vmatprep.subr.mxu0 0.0
    %v180 = vand.u32 %v70, 4294901760
    %181 = vmatpush1.msra.mxu0 %v180
    %182 = vmatprep.subr.mxu0 0.0
    %v183 = vand.u32 %v71, 4294901760
    %184 = vmatpush1.msra.mxu0 %v183
    %185 = vmatprep.subr.mxu0 0.0
    %v186 = vand.u32 %v72, 4294901760
    %187 = vmatpush1.msra.mxu0 %v186
    %188 = vmatprep.subr.mxu0 0.0
    %v189 = vand.u32 %v73, 4294901760
    %190 = vmatpush1.msra.mxu0 %v189
    %191 = vmatprep.subr.mxu0 0.0
    %v192 = vand.u32 %v74, 4294901760
    %193 = vmatpush1.msra.mxu0 %v192
    %194 = vmatprep.subr.mxu0 0.0
    %v195 = vand.u32 %v75, 4294901760
    %196 = vmatpush1.msra.mxu0 %v195
    %197 = vmatprep.subr.mxu0 0.0
    %v198 = vand.u32 %v76, 4294901760
    %199 = vmatpush1.msra.mxu0 %v198
    %200 = vmatprep.subr.mxu0 0.0
    %v201 = vand.u32 %v77, 4294901760
    %202 = vmatpush1.msra.mxu0 %v201
    %203 = vmatprep.subr.mxu0 0.0
    %v204 = vand.u32 %v78, 4294901760
    %205 = vmatpush1.msra.mxu0 %v204
    %206 = vmatprep.subr.mxu0 0.0
    %v207 = vand.u32 %v79, 4294901760
    %208 = vmatpush1.msra.mxu0 %v207
    %209 = vmatprep.subr.mxu0 0.0
    %v210 = vand.u32 %v80, 4294901760
    %211 = vmatpush1.msra.mxu0 %v210
    %212 = vmatprep.subr.mxu0 0.0
    %v213 = vand.u32 %v81, 4294901760
    %214 = vmatpush1.msra.mxu0 %v213
    %215 = vmatprep.subr.mxu0 0.0
    %v216 = vand.u32 %v82, 4294901760
    %217 = vmatpush1.msra.mxu0 %v216
    %v218 = vand.u32 %v44, 4294901760
    %v219 = vsub.f32 %v44, %v218
    %v220 = vand.u32 %v219, 4294901760
    %v221 = vsub.f32 %v219, %v220
    %v222 = vand.u32 %v221, 4294901760
    %223 = vmatprep.mubr.f32.mxu0 %v222
    %v224 = vand.u32 %v43, 4294901760
    %v225 = vsub.f32 %v43, %v224
    %v226 = vand.u32 %v225, 4294901760
    %v227 = vsub.f32 %v225, %v226
    %v228 = vand.u32 %v227, 4294901760
    %229 = vmatmul.mubr.f32.gmra.mrb[0].mxu0 %v228
    %v230 = vpop.f32.mrb[0].mxu0
    %v231 = vadd.f32 %v120, %v230
    %v232 = vpop.f32.mrb[0].mxu0
    %v233 = vand.u32 %v48, 4294901760
    %v234 = vsub.f32 %v48, %v233
    %v235 = vand.u32 %v234, 4294901760
    %v236 = vsub.f32 %v234, %v235
    %v237 = vand.u32 %v236, 4294901760
    %238 = vmatprep.mubr.f32.mxu0 %v237
    %v239 = vand.u32 %v47, 4294901760
    %v240 = vsub.f32 %v47, %v239
    %v241 = vand.u32 %v240, 4294901760
    %v242 = vsub.f32 %v240, %v241
    %v243 = vand.u32 %v242, 4294901760
    %244 = vmatmul.mubr.f32.gmra.mrb[0].mxu0 %v243
    %v245 = vpop.f32.mrb[0].mxu0
    %v246 = vadd.f32 %v120, %v245
    %v247 = vpop.f32.mrb[0].mxu0
    %248 = vdwg.mxu0
    %249 = vmatprep.subr.mxu0 0.0
    %v250 = vand.u32 %v51, 4294901760
    %v251 = vsub.f32 %v51, %v250
    %v252 = vand.u32 %v251, 4294901760
    %v253 = vsub.f32 %v251, %v252
    %v254 = vand.u32 %v253, 4294901760
    %255 = vmatpush1.msra.mxu0 %v254
    %256 = vmatprep.subr.mxu0 0.0
    %v257 = vand.u32 %v52, 4294901760
    %v258 = vsub.f32 %v52, %v257
    %v259 = vand.u32 %v258, 4294901760
    %v260 = vsub.f32 %v258, %v259
    %v261 = vand.u32 %v260, 4294901760
    %262 = vmatpush1.msra.mxu0 %v261
    %263 = vmatprep.subr.mxu0 0.0
    %v264 = vand.u32 %v53, 4294901760
    %v265 = vsub.f32 %v53, %v264
    %v266 = vand.u32 %v265, 4294901760
    %v267 = vsub.f32 %v265, %v266
    %v268 = vand.u32 %v267, 4294901760
    %269 = vmatpush1.msra.mxu0 %v268
    %270 = vmatprep.subr.mxu0 0.0
    %v271 = vand.u32 %v54, 4294901760
    %v272 = vsub.f32 %v54, %v271
    %v273 = vand.u32 %v272, 4294901760
    %v274 = vsub.f32 %v272, %v273
    %v275 = vand.u32 %v274, 4294901760
    %276 = vmatpush1.msra.mxu0 %v275
    %277 = vmatprep.subr.mxu0 0.0
    %v278 = vand.u32 %v55, 4294901760
    %v279 = vsub.f32 %v55, %v278
    %v280 = vand.u32 %v279, 4294901760
    %v281 = vsub.f32 %v279, %v280
    %v282 = vand.u32 %v281, 4294901760
    %283 = vmatpush1.msra.mxu0 %v282
    %284 = vmatprep.subr.mxu0 0.0
    %v285 = vand.u32 %v56, 4294901760
    %v286 = vsub.f32 %v56, %v285
    %v287 = vand.u32 %v286, 4294901760
    %v288 = vsub.f32 %v286, %v287
    %v289 = vand.u32 %v288, 4294901760
    %290 = vmatpush1.msra.mxu0 %v289
    %291 = vmatprep.subr.mxu0 0.0
    %v292 = vand.u32 %v57, 4294901760
    %v293 = vsub.f32 %v57, %v292
    %v294 = vand.u32 %v293, 4294901760
    %v295 = vsub.f32 %v293, %v294
    %v296 = vand.u32 %v295, 4294901760
    %297 = vmatpush1.msra.mxu0 %v296
    %298 = vmatprep.subr.mxu0 0.0
    %v299 = vand.u32 %v58, 4294901760
    %v300 = vsub.f32 %v58, %v299
    %v301 = vand.u32 %v300, 4294901760
    %v302 = vsub.f32 %v300, %v301
    %v303 = vand.u32 %v302, 4294901760
    %304 = vmatpush1.msra.mxu0 %v303
    %305 = vmatprep.subr.mxu0 0.0
    %v306 = vand.u32 %v59, 4294901760
    %v307 = vsub.f32 %v59, %v306
    %v308 = vand.u32 %v307, 4294901760
    %v309 = vsub.f32 %v307, %v308
    %v310 = vand.u32 %v309, 4294901760
    %311 = vmatpush1.msra.mxu0 %v310
    %312 = vmatprep.subr.mxu0 0.0
    %v313 = vand.u32 %v60, 4294901760
    %v314 = vsub.f32 %v60, %v313
    %v315 = vand.u32 %v314, 4294901760
    %v316 = vsub.f32 %v314, %v315
    %v317 = vand.u32 %v316, 4294901760
    %318 = vmatpush1.msra.mxu0 %v317
    %319 = vmatprep.subr.mxu0 0.0
    %v320 = vand.u32 %v61, 4294901760
    %v321 = vsub.f32 %v61, %v320
    %v322 = vand.u32 %v321, 4294901760
    %v323 = vsub.f32 %v321, %v322
    %v324 = vand.u32 %v323, 4294901760
    %325 = vmatpush1.msra.mxu0 %v324
    %326 = vmatprep.subr.mxu0 0.0
    %v327 = vand.u32 %v62, 4294901760
    %v328 = vsub.f32 %v62, %v327
    %v329 = vand.u32 %v328, 4294901760
    %v330 = vsub.f32 %v328, %v329
    %v331 = vand.u32 %v330, 4294901760
    %332 = vmatpush1.msra.mxu0 %v331
    %333 = vmatprep.subr.mxu0 0.0
    %v334 = vand.u32 %v63, 4294901760
    %v335 = vsub.f32 %v63, %v334
    %v336 = vand.u32 %v335, 4294901760
    %v337 = vsub.f32 %v335, %v336
    %v338 = vand.u32 %v337, 4294901760
    %339 = vmatpush1.msra.mxu0 %v338
    %340 = vmatprep.subr.mxu0 0.0
    %v341 = vand.u32 %v64, 4294901760
    %v342 = vsub.f32 %v64, %v341
    %v343 = vand.u32 %v342, 4294901760
    %v344 = vsub.f32 %v342, %v343
    %v345 = vand.u32 %v344, 4294901760
    %346 = vmatpush1.msra.mxu0 %v345
    %347 = vmatprep.subr.mxu0 0.0
    %v348 = vand.u32 %v65, 4294901760
    %v349 = vsub.f32 %v65, %v348
    %v350 = vand.u32 %v349, 4294901760
    %v351 = vsub.f32 %v349, %v350
    %v352 = vand.u32 %v351, 4294901760
    %353 = vmatpush1.msra.mxu0 %v352
    %354 = vmatprep.subr.mxu0 0.0
    %v355 = vand.u32 %v66, 4294901760
    %v356 = vsub.f32 %v66, %v355
    %v357 = vand.u32 %v356, 4294901760
    %v358 = vsub.f32 %v356, %v357
    %v359 = vand.u32 %v358, 4294901760
    %360 = vmatpush1.msra.mxu0 %v359
    %361 = vmatprep.subr.mxu0 0.0
    %v362 = vand.u32 %v67, 4294901760
    %v363 = vsub.f32 %v67, %v362
    %v364 = vand.u32 %v363, 4294901760
    %v365 = vsub.f32 %v363, %v364
    %v366 = vand.u32 %v365, 4294901760
    %367 = vmatpush1.msra.mxu0 %v366
    %368 = vmatprep.subr.mxu0 0.0
    %v369 = vand.u32 %v68, 4294901760
    %v370 = vsub.f32 %v68, %v369
    %v371 = vand.u32 %v370, 4294901760
    %v372 = vsub.f32 %v370, %v371
    %v373 = vand.u32 %v372, 4294901760
    %374 = vmatpush1.msra.mxu0 %v373
    %375 = vmatprep.subr.mxu0 0.0
    %v376 = vand.u32 %v69, 4294901760
    %v377 = vsub.f32 %v69, %v376
    %v378 = vand.u32 %v377, 4294901760
    %v379 = vsub.f32 %v377, %v378
    %v380 = vand.u32 %v379, 4294901760
    %381 = vmatpush1.msra.mxu0 %v380
    %382 = vmatprep.subr.mxu0 0.0
    %v383 = vand.u32 %v70, 4294901760
    %v384 = vsub.f32 %v70, %v383
    %v385 = vand.u32 %v384, 4294901760
    %v386 = vsub.f32 %v384, %v385
    %v387 = vand.u32 %v386, 4294901760
    %388 = vmatpush1.msra.mxu0 %v387
    %389 = vmatprep.subr.mxu0 0.0
    %v390 = vand.u32 %v71, 4294901760
    %v391 = vsub.f32 %v71, %v390
    %v392 = vand.u32 %v391, 4294901760
    %v393 = vsub.f32 %v391, %v392
    %v394 = vand.u32 %v393, 4294901760
    %395 = vmatpush1.msra.mxu0 %v394
    %396 = vmatprep.subr.mxu0 0.0
    %v397 = vand.u32 %v72, 4294901760
    %v398 = vsub.f32 %v72, %v397
    %v399 = vand.u32 %v398, 4294901760
    %v400 = vsub.f32 %v398, %v399
    %v401 = vand.u32 %v400, 4294901760
    %402 = vmatpush1.msra.mxu0 %v401
    %403 = vmatprep.subr.mxu0 0.0
    %v404 = vand.u32 %v73, 4294901760
    %v405 = vsub.f32 %v73, %v404
    %v406 = vand.u32 %v405, 4294901760
    %v407 = vsub.f32 %v405, %v406
    %v408 = vand.u32 %v407, 4294901760
    %409 = vmatpush1.msra.mxu0 %v408
    %410 = vmatprep.subr.mxu0 0.0
    %v411 = vand.u32 %v74, 4294901760
    %v412 = vsub.f32 %v74, %v411
    %v413 = vand.u32 %v412, 4294901760
    %v414 = vsub.f32 %v412, %v413
    %v415 = vand.u32 %v414, 4294901760
    %416 = vmatpush1.msra.mxu0 %v415
    %417 = vmatprep.subr.mxu0 0.0
    %v418 = vand.u32 %v75, 4294901760
    %v419 = vsub.f32 %v75, %v418
    %v420 = vand.u32 %v419, 4294901760
    %v421 = vsub.f32 %v419, %v420
    %v422 = vand.u32 %v421, 4294901760
    %423 = vmatpush1.msra.mxu0 %v422
    %424 = vmatprep.subr.mxu0 0.0
    %v425 = vand.u32 %v76, 4294901760
    %v426 = vsub.f32 %v76, %v425
    %v427 = vand.u32 %v426, 4294901760
    %v428 = vsub.f32 %v426, %v427
    %v429 = vand.u32 %v428, 4294901760
    %430 = vmatpush1.msra.mxu0 %v429
    %431 = vmatprep.subr.mxu0 0.0
    %v432 = vand.u32 %v77, 4294901760
    %v433 = vsub.f32 %v77, %v432
    %v434 = vand.u32 %v433, 4294901760
    %v435 = vsub.f32 %v433, %v434
    %v436 = vand.u32 %v435, 4294901760
    %437 = vmatpush1.msra.mxu0 %v436
    %438 = vmatprep.subr.mxu0 0.0
    %v439 = vand.u32 %v78, 4294901760
    %v440 = vsub.f32 %v78, %v439
    %v441 = vand.u32 %v440, 4294901760
    %v442 = vsub.f32 %v440, %v441
    %v443 = vand.u32 %v442, 4294901760
    %444 = vmatpush1.msra.mxu0 %v443
    %445 = vmatprep.subr.mxu0 0.0
    %v446 = vand.u32 %v79, 4294901760
    %v447 = vsub.f32 %v79, %v446
    %v448 = vand.u32 %v447, 4294901760
    %v449 = vsub.f32 %v447, %v448
    %v450 = vand.u32 %v449, 4294901760
    %451 = vmatpush1.msra.mxu0 %v450
    %452 = vmatprep.subr.mxu0 0.0
    %v453 = vand.u32 %v80, 4294901760
    %v454 = vsub.f32 %v80, %v453
    %v455 = vand.u32 %v454, 4294901760
    %v456 = vsub.f32 %v454, %v455
    %v457 = vand.u32 %v456, 4294901760
    %458 = vmatpush1.msra.mxu0 %v457
    %459 = vmatprep.subr.mxu0 0.0
    %v460 = vand.u32 %v81, 4294901760
    %v461 = vsub.f32 %v81, %v460
    %v462 = vand.u32 %v461, 4294901760
    %v463 = vsub.f32 %v461, %v462
    %v464 = vand.u32 %v463, 4294901760
    %465 = vmatpush1.msra.mxu0 %v464
    %466 = vmatprep.subr.mxu0 0.0
    %v467 = vand.u32 %v82, 4294901760
    %v468 = vsub.f32 %v82, %v467
    %v469 = vand.u32 %v468, 4294901760
    %v470 = vsub.f32 %v468, %v469
    %v471 = vand.u32 %v470, 4294901760
    %472 = vmatpush1.msra.mxu0 %v471
    %v473 = vand.u32 %v44, 4294901760
    %474 = vmatprep.mubr.f32.mxu0 %v473
    %v475 = vand.u32 %v43, 4294901760
    %476 = vmatmul.mubr.f32.gmra.mrb[0].mxu0 %v475
    %v477 = vpop.f32.mrb[0].mxu0
    %v478 = vadd.f32 %v231, %v477
    %v479 = vpop.f32.mrb[0].mxu0
    %v480 = vand.u32 %v48, 4294901760
    %481 = vmatprep.mubr.f32.mxu0 %v480
    %v482 = vand.u32 %v47, 4294901760
    %483 = vmatmul.mubr.f32.gmra.mrb[0].mxu0 %v482
    %v484 = vpop.f32.mrb[0].mxu0
    %v485 = vadd.f32 %v246, %v484
    %v486 = vpop.f32.mrb[0].mxu0
    %487 = vdwg.mxu0
    %488 = vmatprep.subr.mxu0 0.0
    %v489 = vand.u32 %v51, 4294901760
    %v490 = vsub.f32 %v51, %v489
    %491 = vmatpush1.msra.mxu0 %v490
    %492 = vmatprep.subr.mxu0 0.0
    %v493 = vand.u32 %v52, 4294901760
    %v494 = vsub.f32 %v52, %v493
    %495 = vmatpush1.msra.mxu0 %v494
    %496 = vmatprep.subr.mxu0 0.0
    %v497 = vand.u32 %v53, 4294901760
    %v498 = vsub.f32 %v53, %v497
    %499 = vmatpush1.msra.mxu0 %v498
    %500 = vmatprep.subr.mxu0 0.0
    %v501 = vand.u32 %v54, 4294901760
    %v502 = vsub.f32 %v54, %v501
    %503 = vmatpush1.msra.mxu0 %v502
    %504 = vmatprep.subr.mxu0 0.0
    %v505 = vand.u32 %v55, 4294901760
    %v506 = vsub.f32 %v55, %v505
    %507 = vmatpush1.msra.mxu0 %v506
    %508 = vmatprep.subr.mxu0 0.0
    %v509 = vand.u32 %v56, 4294901760
    %v510 = vsub.f32 %v56, %v509
    %511 = vmatpush1.msra.mxu0 %v510
    %512 = vmatprep.subr.mxu0 0.0
    %v513 = vand.u32 %v57, 4294901760
    %v514 = vsub.f32 %v57, %v513
    %515 = vmatpush1.msra.mxu0 %v514
    %516 = vmatprep.subr.mxu0 0.0
    %v517 = vand.u32 %v58, 4294901760
    %v518 = vsub.f32 %v58, %v517
    %519 = vmatpush1.msra.mxu0 %v518
    %520 = vmatprep.subr.mxu0 0.0
    %v521 = vand.u32 %v59, 4294901760
    %v522 = vsub.f32 %v59, %v521
    %523 = vmatpush1.msra.mxu0 %v522
    %524 = vmatprep.subr.mxu0 0.0
    %v525 = vand.u32 %v60, 4294901760
    %v526 = vsub.f32 %v60, %v525
    %527 = vmatpush1.msra.mxu0 %v526
    %528 = vmatprep.subr.mxu0 0.0
    %v529 = vand.u32 %v61, 4294901760
    %v530 = vsub.f32 %v61, %v529
    %531 = vmatpush1.msra.mxu0 %v530
    %532 = vmatprep.subr.mxu0 0.0
    %v533 = vand.u32 %v62, 4294901760
    %v534 = vsub.f32 %v62, %v533
    %535 = vmatpush1.msra.mxu0 %v534
    %536 = vmatprep.subr.mxu0 0.0
    %v537 = vand.u32 %v63, 4294901760
    %v538 = vsub.f32 %v63, %v537
    %539 = vmatpush1.msra.mxu0 %v538
    %540 = vmatprep.subr.mxu0 0.0
    %v541 = vand.u32 %v64, 4294901760
    %v542 = vsub.f32 %v64, %v541
    %543 = vmatpush1.msra.mxu0 %v542
    %544 = vmatprep.subr.mxu0 0.0
    %v545 = vand.u32 %v65, 4294901760
    %v546 = vsub.f32 %v65, %v545
    %547 = vmatpush1.msra.mxu0 %v546
    %548 = vmatprep.subr.mxu0 0.0
    %v549 = vand.u32 %v66, 4294901760
    %v550 = vsub.f32 %v66, %v549
    %551 = vmatpush1.msra.mxu0 %v550
    %552 = vmatprep.subr.mxu0 0.0
    %v553 = vand.u32 %v67, 4294901760
    %v554 = vsub.f32 %v67, %v553
    %555 = vmatpush1.msra.mxu0 %v554
    %556 = vmatprep.subr.mxu0 0.0
    %v557 = vand.u32 %v68, 4294901760
    %v558 = vsub.f32 %v68, %v557
    %559 = vmatpush1.msra.mxu0 %v558
    %560 = vmatprep.subr.mxu0 0.0
    %v561 = vand.u32 %v69, 4294901760
    %v562 = vsub.f32 %v69, %v561
    %563 = vmatpush1.msra.mxu0 %v562
    %564 = vmatprep.subr.mxu0 0.0
    %v565 = vand.u32 %v70, 4294901760
    %v566 = vsub.f32 %v70, %v565
    %567 = vmatpush1.msra.mxu0 %v566
    %568 = vmatprep.subr.mxu0 0.0
    %v569 = vand.u32 %v71, 4294901760
    %v570 = vsub.f32 %v71, %v569
    %571 = vmatpush1.msra.mxu0 %v570
    %572 = vmatprep.subr.mxu0 0.0
    %v573 = vand.u32 %v72, 4294901760
    %v574 = vsub.f32 %v72, %v573
    %575 = vmatpush1.msra.mxu0 %v574
    %576 = vmatprep.subr.mxu0 0.0
    %v577 = vand.u32 %v73, 4294901760
    %v578 = vsub.f32 %v73, %v577
    %579 = vmatpush1.msra.mxu0 %v578
    %580 = vmatprep.subr.mxu0 0.0
    %v581 = vand.u32 %v74, 4294901760
    %v582 = vsub.f32 %v74, %v581
    %583 = vmatpush1.msra.mxu0 %v582
    %584 = vmatprep.subr.mxu0 0.0
    %v585 = vand.u32 %v75, 4294901760
    %v586 = vsub.f32 %v75, %v585
    %587 = vmatpush1.msra.mxu0 %v586
    %588 = vmatprep.subr.mxu0 0.0
    %v589 = vand.u32 %v76, 4294901760
    %v590 = vsub.f32 %v76, %v589
    %591 = vmatpush1.msra.mxu0 %v590
    %592 = vmatprep.subr.mxu0 0.0
    %v593 = vand.u32 %v77, 4294901760
    %v594 = vsub.f32 %v77, %v593
    %595 = vmatpush1.msra.mxu0 %v594
    %596 = vmatprep.subr.mxu0 0.0
    %v597 = vand.u32 %v78, 4294901760
    %v598 = vsub.f32 %v78, %v597
    %599 = vmatpush1.msra.mxu0 %v598
    %600 = vmatprep.subr.mxu0 0.0
    %v601 = vand.u32 %v79, 4294901760
    %v602 = vsub.f32 %v79, %v601
    %603 = vmatpush1.msra.mxu0 %v602
    %604 = vmatprep.subr.mxu0 0.0
    %v605 = vand.u32 %v80, 4294901760
    %v606 = vsub.f32 %v80, %v605
    %607 = vmatpush1.msra.mxu0 %v606
    %608 = vmatprep.subr.mxu0 0.0
    %v609 = vand.u32 %v81, 4294901760
    %v610 = vsub.f32 %v81, %v609
    %611 = vmatpush1.msra.mxu0 %v610
    %612 = vmatprep.subr.mxu0 0.0
    %v613 = vand.u32 %v82, 4294901760
    %v614 = vsub.f32 %v82, %v613
    %615 = vmatpush1.msra.mxu0 %v614
    %v616 = vand.u32 %v44, 4294901760
    %v617 = vsub.f32 %v44, %v616
    %618 = vmatprep.mubr.f32.mxu0 %v617
    %v619 = vand.u32 %v43, 4294901760
    %v620 = vsub.f32 %v43, %v619
    %621 = vmatmul.mubr.f32.gmra.mrb[0].mxu0 %v620
    %v622 = vpop.f32.mrb[0].mxu0
    %v623 = vadd.f32 %v478, %v622
    %v624 = vpop.f32.mrb[0].mxu0
    %v625 = vand.u32 %v48, 4294901760
    %v626 = vsub.f32 %v48, %v625
    %627 = vmatprep.mubr.f32.mxu0 %v626
    %v628 = vand.u32 %v47, 4294901760
    %v629 = vsub.f32 %v47, %v628
    %630 = vmatmul.mubr.f32.gmra.mrb[0].mxu0 %v629
    %v631 = vpop.f32.mrb[0].mxu0
    %v632 = vadd.f32 %v485, %v631
    %v633 = vpop.f32.mrb[0].mxu0
    %634 = vdwg.mxu0
    %635 = vmatprep.subr.mxu0 0.0
    %v636 = vand.u32 %v51, 4294901760
    %637 = vmatpush1.msra.mxu0 %v636
    %638 = vmatprep.subr.mxu0 0.0
    %v639 = vand.u32 %v52, 4294901760
    %640 = vmatpush1.msra.mxu0 %v639
    %641 = vmatprep.subr.mxu0 0.0
    %v642 = vand.u32 %v53, 4294901760
    %643 = vmatpush1.msra.mxu0 %v642
    %644 = vmatprep.subr.mxu0 0.0
    %v645 = vand.u32 %v54, 4294901760
    %646 = vmatpush1.msra.mxu0 %v645
    %647 = vmatprep.subr.mxu0 0.0
    %v648 = vand.u32 %v55, 4294901760
    %649 = vmatpush1.msra.mxu0 %v648
    %650 = vmatprep.subr.mxu0 0.0
    %v651 = vand.u32 %v56, 4294901760
    %652 = vmatpush1.msra.mxu0 %v651
    %653 = vmatprep.subr.mxu0 0.0
    %v654 = vand.u32 %v57, 4294901760
    %655 = vmatpush1.msra.mxu0 %v654
    %656 = vmatprep.subr.mxu0 0.0
    %v657 = vand.u32 %v58, 4294901760
    %658 = vmatpush1.msra.mxu0 %v657
    %659 = vmatprep.subr.mxu0 0.0
    %v660 = vand.u32 %v59, 4294901760
    %661 = vmatpush1.msra.mxu0 %v660
    %662 = vmatprep.subr.mxu0 0.0
    %v663 = vand.u32 %v60, 4294901760
    %664 = vmatpush1.msra.mxu0 %v663
    %665 = vmatprep.subr.mxu0 0.0
    %v666 = vand.u32 %v61, 4294901760
    %667 = vmatpush1.msra.mxu0 %v666
    %668 = vmatprep.subr.mxu0 0.0
    %v669 = vand.u32 %v62, 4294901760
    %670 = vmatpush1.msra.mxu0 %v669
    %671 = vmatprep.subr.mxu0 0.0
    %v672 = vand.u32 %v63, 4294901760
    %673 = vmatpush1.msra.mxu0 %v672
    %674 = vmatprep.subr.mxu0 0.0
    %v675 = vand.u32 %v64, 4294901760
    %676 = vmatpush1.msra.mxu0 %v675
    %677 = vmatprep.subr.mxu0 0.0
    %v678 = vand.u32 %v65, 4294901760
    %679 = vmatpush1.msra.mxu0 %v678
    %680 = vmatprep.subr.mxu0 0.0
    %v681 = vand.u32 %v66, 4294901760
    %682 = vmatpush1.msra.mxu0 %v681
    %683 = vmatprep.subr.mxu0 0.0
    %v684 = vand.u32 %v67, 4294901760
    %685 = vmatpush1.msra.mxu0 %v684
    %686 = vmatprep.subr.mxu0 0.0
    %v687 = vand.u32 %v68, 4294901760
    %688 = vmatpush1.msra.mxu0 %v687
    %689 = vmatprep.subr.mxu0 0.0
    %v690 = vand.u32 %v69, 4294901760
    %691 = vmatpush1.msra.mxu0 %v690
    %692 = vmatprep.subr.mxu0 0.0
    %v693 = vand.u32 %v70, 4294901760
    %694 = vmatpush1.msra.mxu0 %v693
    %695 = vmatprep.subr.mxu0 0.0
    %v696 = vand.u32 %v71, 4294901760
    %697 = vmatpush1.msra.mxu0 %v696
    %698 = vmatprep.subr.mxu0 0.0
    %v699 = vand.u32 %v72, 4294901760
    %700 = vmatpush1.msra.mxu0 %v699
    %701 = vmatprep.subr.mxu0 0.0
    %v702 = vand.u32 %v73, 4294901760
    %703 = vmatpush1.msra.mxu0 %v702
    %704 = vmatprep.subr.mxu0 0.0
    %v705 = vand.u32 %v74, 4294901760
    %706 = vmatpush1.msra.mxu0 %v705
    %707 = vmatprep.subr.mxu0 0.0
    %v708 = vand.u32 %v75, 4294901760
    %709 = vmatpush1.msra.mxu0 %v708
    %710 = vmatprep.subr.mxu0 0.0
    %v711 = vand.u32 %v76, 4294901760
    %712 = vmatpush1.msra.mxu0 %v711
    %713 = vmatprep.subr.mxu0 0.0
    %v714 = vand.u32 %v77, 4294901760
    %715 = vmatpush1.msra.mxu0 %v714
    %716 = vmatprep.subr.mxu0 0.0
    %v717 = vand.u32 %v78, 4294901760
    %718 = vmatpush1.msra.mxu0 %v717
    %719 = vmatprep.subr.mxu0 0.0
    %v720 = vand.u32 %v79, 4294901760
    %721 = vmatpush1.msra.mxu0 %v720
    %722 = vmatprep.subr.mxu0 0.0
    %v723 = vand.u32 %v80, 4294901760
    %724 = vmatpush1.msra.mxu0 %v723
    %725 = vmatprep.subr.mxu0 0.0
    %v726 = vand.u32 %v81, 4294901760
    %727 = vmatpush1.msra.mxu0 %v726
    %728 = vmatprep.subr.mxu0 0.0
    %v729 = vand.u32 %v82, 4294901760
    %730 = vmatpush1.msra.mxu0 %v729
    %v731 = vand.u32 %v44, 4294901760
    %v732 = vsub.f32 %v44, %v731
    %v733 = vand.u32 %v732, 4294901760
    %734 = vmatprep.mubr.f32.mxu0 %v733
    %v735 = vand.u32 %v43, 4294901760
    %v736 = vsub.f32 %v43, %v735
    %v737 = vand.u32 %v736, 4294901760
    %738 = vmatmul.mubr.f32.gmra.mrb[0].mxu0 %v737
    %v739 = vpop.f32.mrb[0].mxu0
    %v740 = vadd.f32 %v623, %v739
    %v741 = vpop.f32.mrb[0].mxu0
    %v742 = vand.u32 %v48, 4294901760
    %v743 = vsub.f32 %v48, %v742
    %v744 = vand.u32 %v743, 4294901760
    %745 = vmatprep.mubr.f32.mxu0 %v744
    %v746 = vand.u32 %v47, 4294901760
    %v747 = vsub.f32 %v47, %v746
    %v748 = vand.u32 %v747, 4294901760
    %749 = vmatmul.mubr.f32.gmra.mrb[0].mxu0 %v748
    %v750 = vpop.f32.mrb[0].mxu0
    %v751 = vadd.f32 %v632, %v750
    %v752 = vpop.f32.mrb[0].mxu0
    %753 = vdwg.mxu0
    %754 = vmatprep.subr.mxu0 0.0
    %v755 = vand.u32 %v51, 4294901760
    %v756 = vsub.f32 %v51, %v755
    %v757 = vand.u32 %v756, 4294901760
    %758 = vmatpush1.msra.mxu0 %v757
    %759 = vmatprep.subr.mxu0 0.0
    %v760 = vand.u32 %v52, 4294901760
    %v761 = vsub.f32 %v52, %v760
    %v762 = vand.u32 %v761, 4294901760
    %763 = vmatpush1.msra.mxu0 %v762
    %764 = vmatprep.subr.mxu0 0.0
    %v765 = vand.u32 %v53, 4294901760
    %v766 = vsub.f32 %v53, %v765
    %v767 = vand.u32 %v766, 4294901760
    %768 = vmatpush1.msra.mxu0 %v767
    %769 = vmatprep.subr.mxu0 0.0
    %v770 = vand.u32 %v54, 4294901760
    %v771 = vsub.f32 %v54, %v770
    %v772 = vand.u32 %v771, 4294901760
    %773 = vmatpush1.msra.mxu0 %v772
    %774 = vmatprep.subr.mxu0 0.0
    %v775 = vand.u32 %v55, 4294901760
    %v776 = vsub.f32 %v55, %v775
    %v777 = vand.u32 %v776, 4294901760
    %778 = vmatpush1.msra.mxu0 %v777
    %779 = vmatprep.subr.mxu0 0.0
    %v780 = vand.u32 %v56, 4294901760
    %v781 = vsub.f32 %v56, %v780
    %v782 = vand.u32 %v781, 4294901760
    %783 = vmatpush1.msra.mxu0 %v782
    %784 = vmatprep.subr.mxu0 0.0
    %v785 = vand.u32 %v57, 4294901760
    %v786 = vsub.f32 %v57, %v785
    %v787 = vand.u32 %v786, 4294901760
    %788 = vmatpush1.msra.mxu0 %v787
    %789 = vmatprep.subr.mxu0 0.0
    %v790 = vand.u32 %v58, 4294901760
    %v791 = vsub.f32 %v58, %v790
    %v792 = vand.u32 %v791, 4294901760
    %793 = vmatpush1.msra.mxu0 %v792
    %794 = vmatprep.subr.mxu0 0.0
    %v795 = vand.u32 %v59, 4294901760
    %v796 = vsub.f32 %v59, %v795
    %v797 = vand.u32 %v796, 4294901760
    %798 = vmatpush1.msra.mxu0 %v797
    %799 = vmatprep.subr.mxu0 0.0
    %v800 = vand.u32 %v60, 4294901760
    %v801 = vsub.f32 %v60, %v800
    %v802 = vand.u32 %v801, 4294901760
    %803 = vmatpush1.msra.mxu0 %v802
    %804 = vmatprep.subr.mxu0 0.0
    %v805 = vand.u32 %v61, 4294901760
    %v806 = vsub.f32 %v61, %v805
    %v807 = vand.u32 %v806, 4294901760
    %808 = vmatpush1.msra.mxu0 %v807
    %809 = vmatprep.subr.mxu0 0.0
    %v810 = vand.u32 %v62, 4294901760
    %v811 = vsub.f32 %v62, %v810
    %v812 = vand.u32 %v811, 4294901760
    %813 = vmatpush1.msra.mxu0 %v812
    %814 = vmatprep.subr.mxu0 0.0
    %v815 = vand.u32 %v63, 4294901760
    %v816 = vsub.f32 %v63, %v815
    %v817 = vand.u32 %v816, 4294901760
    %818 = vmatpush1.msra.mxu0 %v817
    %819 = vmatprep.subr.mxu0 0.0
    %v820 = vand.u32 %v64, 4294901760
    %v821 = vsub.f32 %v64, %v820
    %v822 = vand.u32 %v821, 4294901760
    %823 = vmatpush1.msra.mxu0 %v822
    %824 = vmatprep.subr.mxu0 0.0
    %v825 = vand.u32 %v65, 4294901760
    %v826 = vsub.f32 %v65, %v825
    %v827 = vand.u32 %v826, 4294901760
    %828 = vmatpush1.msra.mxu0 %v827
    %829 = vmatprep.subr.mxu0 0.0
    %v830 = vand.u32 %v66, 4294901760
    %v831 = vsub.f32 %v66, %v830
    %v832 = vand.u32 %v831, 4294901760
    %833 = vmatpush1.msra.mxu0 %v832
    %834 = vmatprep.subr.mxu0 0.0
    %v835 = vand.u32 %v67, 4294901760
    %v836 = vsub.f32 %v67, %v835
    %v837 = vand.u32 %v836, 4294901760
    %838 = vmatpush1.msra.mxu0 %v837
    %839 = vmatprep.subr.mxu0 0.0
    %v840 = vand.u32 %v68, 4294901760
    %v841 = vsub.f32 %v68, %v840
    %v842 = vand.u32 %v841, 4294901760
    %843 = vmatpush1.msra.mxu0 %v842
    %844 = vmatprep.subr.mxu0 0.0
    %v845 = vand.u32 %v69, 4294901760
    %v846 = vsub.f32 %v69, %v845
    %v847 = vand.u32 %v846, 4294901760
    %848 = vmatpush1.msra.mxu0 %v847
    %849 = vmatprep.subr.mxu0 0.0
    %v850 = vand.u32 %v70, 4294901760
    %v851 = vsub.f32 %v70, %v850
    %v852 = vand.u32 %v851, 4294901760
    %853 = vmatpush1.msra.mxu0 %v852
    %854 = vmatprep.subr.mxu0 0.0
    %v855 = vand.u32 %v71, 4294901760
    %v856 = vsub.f32 %v71, %v855
    %v857 = vand.u32 %v856, 4294901760
    %858 = vmatpush1.msra.mxu0 %v857
    %859 = vmatprep.subr.mxu0 0.0
    %v860 = vand.u32 %v72, 4294901760
    %v861 = vsub.f32 %v72, %v860
    %v862 = vand.u32 %v861, 4294901760
    %863 = vmatpush1.msra.mxu0 %v862
    %864 = vmatprep.subr.mxu0 0.0
    %v865 = vand.u32 %v73, 4294901760
    %v866 = vsub.f32 %v73, %v865
    %v867 = vand.u32 %v866, 4294901760
    %868 = vmatpush1.msra.mxu0 %v867
    %869 = vmatprep.subr.mxu0 0.0
    %v870 = vand.u32 %v74, 4294901760
    %v871 = vsub.f32 %v74, %v870
    %v872 = vand.u32 %v871, 4294901760
    %873 = vmatpush1.msra.mxu0 %v872
    %874 = vmatprep.subr.mxu0 0.0
    %v875 = vand.u32 %v75, 4294901760
    %v876 = vsub.f32 %v75, %v875
    %v877 = vand.u32 %v876, 4294901760
    %878 = vmatpush1.msra.mxu0 %v877
    %879 = vmatprep.subr.mxu0 0.0
    %v880 = vand.u32 %v76, 4294901760
    %v881 = vsub.f32 %v76, %v880
    %v882 = vand.u32 %v881, 4294901760
    %883 = vmatpush1.msra.mxu0 %v882
    %884 = vmatprep.subr.mxu0 0.0
    %v885 = vand.u32 %v77, 4294901760
    %v886 = vsub.f32 %v77, %v885
    %v887 = vand.u32 %v886, 4294901760
    %888 = vmatpush1.msra.mxu0 %v887
    %889 = vmatprep.subr.mxu0 0.0
    %v890 = vand.u32 %v78, 4294901760
    %v891 = vsub.f32 %v78, %v890
    %v892 = vand.u32 %v891, 4294901760
    %893 = vmatpush1.msra.mxu0 %v892
    %894 = vmatprep.subr.mxu0 0.0
    %v895 = vand.u32 %v79, 4294901760
    %v896 = vsub.f32 %v79, %v895
    %v897 = vand.u32 %v896, 4294901760
    %898 = vmatpush1.msra.mxu0 %v897
    %899 = vmatprep.subr.mxu0 0.0
    %v900 = vand.u32 %v80, 4294901760
    %v901 = vsub.f32 %v80, %v900
    %v902 = vand.u32 %v901, 4294901760
    %903 = vmatpush1.msra.mxu0 %v902
    %904 = vmatprep.subr.mxu0 0.0
    %v905 = vand.u32 %v81, 4294901760
    %v906 = vsub.f32 %v81, %v905
    %v907 = vand.u32 %v906, 4294901760
    %908 = vmatpush1.msra.mxu0 %v907
    %909 = vmatprep.subr.mxu0 0.0
    %v910 = vand.u32 %v82, 4294901760
    %v911 = vsub.f32 %v82, %v910
    %v912 = vand.u32 %v911, 4294901760
    %913 = vmatpush1.msra.mxu0 %v912
    %v914 = vand.u32 %v44, 4294901760
    %915 = vmatprep.mubr.f32.mxu0 %v914
    %v916 = vand.u32 %v43, 4294901760
    %917 = vmatmul.mubr.f32.gmra.mrb[0].mxu0 %v916
    %v918 = vpop.f32.mrb[0].mxu0
    %v919 = vadd.f32 %v740, %v918
    %v920 = vpop.f32.mrb[0].mxu0
    %v921 = vand.u32 %v48, 4294901760
    %922 = vmatprep.mubr.f32.mxu0 %v921
    %v923 = vand.u32 %v47, 4294901760
    %924 = vmatmul.mubr.f32.gmra.mrb[0].mxu0 %v923
    %v925 = vpop.f32.mrb[0].mxu0
    %v926 = vadd.f32 %v751, %v925
    %v927 = vpop.f32.mrb[0].mxu0
    %928 = vdwg.mxu0
    %929 = vmatprep.subr.mxu0 0.0
    %v930 = vand.u32 %v51, 4294901760
    %931 = vmatpush1.msra.mxu0 %v930
    %932 = vmatprep.subr.mxu0 0.0
    %v933 = vand.u32 %v52, 4294901760
    %934 = vmatpush1.msra.mxu0 %v933
    %935 = vmatprep.subr.mxu0 0.0
    %v936 = vand.u32 %v53, 4294901760
    %937 = vmatpush1.msra.mxu0 %v936
    %938 = vmatprep.subr.mxu0 0.0
    %v939 = vand.u32 %v54, 4294901760
    %940 = vmatpush1.msra.mxu0 %v939
    %941 = vmatprep.subr.mxu0 0.0
    %v942 = vand.u32 %v55, 4294901760
    %943 = vmatpush1.msra.mxu0 %v942
    %944 = vmatprep.subr.mxu0 0.0
    %v945 = vand.u32 %v56, 4294901760
    %946 = vmatpush1.msra.mxu0 %v945
    %947 = vmatprep.subr.mxu0 0.0
    %v948 = vand.u32 %v57, 4294901760
    %949 = vmatpush1.msra.mxu0 %v948
    %950 = vmatprep.subr.mxu0 0.0
    %v951 = vand.u32 %v58, 4294901760
    %952 = vmatpush1.msra.mxu0 %v951
    %953 = vmatprep.subr.mxu0 0.0
    %v954 = vand.u32 %v59, 4294901760
    %955 = vmatpush1.msra.mxu0 %v954
    %956 = vmatprep.subr.mxu0 0.0
    %v957 = vand.u32 %v60, 4294901760
    %958 = vmatpush1.msra.mxu0 %v957
    %959 = vmatprep.subr.mxu0 0.0
    %v960 = vand.u32 %v61, 4294901760
    %961 = vmatpush1.msra.mxu0 %v960
    %962 = vmatprep.subr.mxu0 0.0
    %v963 = vand.u32 %v62, 4294901760
    %964 = vmatpush1.msra.mxu0 %v963
    %965 = vmatprep.subr.mxu0 0.0
    %v966 = vand.u32 %v63, 4294901760
    %967 = vmatpush1.msra.mxu0 %v966
    %968 = vmatprep.subr.mxu0 0.0
    %v969 = vand.u32 %v64, 4294901760
    %970 = vmatpush1.msra.mxu0 %v969
    %971 = vmatprep.subr.mxu0 0.0
    %v972 = vand.u32 %v65, 4294901760
    %973 = vmatpush1.msra.mxu0 %v972
    %974 = vmatprep.subr.mxu0 0.0
    %v975 = vand.u32 %v66, 4294901760
    %976 = vmatpush1.msra.mxu0 %v975
    %977 = vmatprep.subr.mxu0 0.0
    %v978 = vand.u32 %v67, 4294901760
    %979 = vmatpush1.msra.mxu0 %v978
    %980 = vmatprep.subr.mxu0 0.0
    %v981 = vand.u32 %v68, 4294901760
    %982 = vmatpush1.msra.mxu0 %v981
    %983 = vmatprep.subr.mxu0 0.0
    %v984 = vand.u32 %v69, 4294901760
    %985 = vmatpush1.msra.mxu0 %v984
    %986 = vmatprep.subr.mxu0 0.0
    %v987 = vand.u32 %v70, 4294901760
    %988 = vmatpush1.msra.mxu0 %v987
    %989 = vmatprep.subr.mxu0 0.0
    %v990 = vand.u32 %v71, 4294901760
    %991 = vmatpush1.msra.mxu0 %v990
    %992 = vmatprep.subr.mxu0 0.0
    %v993 = vand.u32 %v72, 4294901760
    %994 = vmatpush1.msra.mxu0 %v993
    %995 = vmatprep.subr.mxu0 0.0
    %v996 = vand.u32 %v73, 4294901760
    %997 = vmatpush1.msra.mxu0 %v996
    %998 = vmatprep.subr.mxu0 0.0
    %v999 = vand.u32 %v74, 4294901760
    %1000 = vmatpush1.msra.mxu0 %v999
    %1001 = vmatprep.subr.mxu0 0.0
    %v1002 = vand.u32 %v75, 4294901760
    %1003 = vmatpush1.msra.mxu0 %v1002
    %1004 = vmatprep.subr.mxu0 0.0
    %v1005 = vand.u32 %v76, 4294901760
    %1006 = vmatpush1.msra.mxu0 %v1005
    %1007 = vmatprep.subr.mxu0 0.0
    %v1008 = vand.u32 %v77, 4294901760
    %1009 = vmatpush1.msra.mxu0 %v1008
    %1010 = vmatprep.subr.mxu0 0.0
    %v1011 = vand.u32 %v78, 4294901760
    %1012 = vmatpush1.msra.mxu0 %v1011
    %1013 = vmatprep.subr.mxu0 0.0
    %v1014 = vand.u32 %v79, 4294901760
    %1015 = vmatpush1.msra.mxu0 %v1014
    %1016 = vmatprep.subr.mxu0 0.0
    %v1017 = vand.u32 %v80, 4294901760
    %1018 = vmatpush1.msra.mxu0 %v1017
    %1019 = vmatprep.subr.mxu0 0.0
    %v1020 = vand.u32 %v81, 4294901760
    %1021 = vmatpush1.msra.mxu0 %v1020
    %1022 = vmatprep.subr.mxu0 0.0
    %v1023 = vand.u32 %v82, 4294901760
    %1024 = vmatpush1.msra.mxu0 %v1023
    %v1025 = vand.u32 %v44, 4294901760
    %1026 = vmatprep.mubr.f32.mxu0 %v1025
    %v1027 = vand.u32 %v43, 4294901760
    %1028 = vmatmul.mubr.f32.gmra.mrb[0].mxu0 %v1027
    %v1029 = vpop.f32.mrb[0].mxu0
    %v1030 = vadd.f32 %v919, %v1029
    %v1031 = vpop.f32.mrb[0].mxu0
    %v1032 = vand.u32 %v48, 4294901760
    %1033 = vmatprep.mubr.f32.mxu0 %v1032
    %v1034 = vand.u32 %v47, 4294901760
    %1035 = vmatmul.mubr.f32.gmra.mrb[0].mxu0 %v1034
    %v1036 = vpop.f32.mrb[0].mxu0
    %v1037 = vadd.f32 %v926, %v1036
    %v1038 = vpop.f32.mrb[0].mxu0
    %1039 = vdwg.mxu0
    %1040 = vmatprep.subr.mxu0 0.0
    %v1041 = vand.u32 %v83, 4294901760
    %1042 = vmatpush1.msra.mxu0 %v1041
    %1043 = vmatprep.subr.mxu0 0.0
    %v1044 = vand.u32 %v84, 4294901760
    %1045 = vmatpush1.msra.mxu0 %v1044
    %1046 = vmatprep.subr.mxu0 0.0
    %v1047 = vand.u32 %v85, 4294901760
    %1048 = vmatpush1.msra.mxu0 %v1047
    %1049 = vmatprep.subr.mxu0 0.0
    %v1050 = vand.u32 %v86, 4294901760
    %1051 = vmatpush1.msra.mxu0 %v1050
    %1052 = vmatprep.subr.mxu0 0.0
    %v1053 = vand.u32 %v87, 4294901760
    %1054 = vmatpush1.msra.mxu0 %v1053
    %1055 = vmatprep.subr.mxu0 0.0
    %v1056 = vand.u32 %v88, 4294901760
    %1057 = vmatpush1.msra.mxu0 %v1056
    %1058 = vmatprep.subr.mxu0 0.0
    %v1059 = vand.u32 %v89, 4294901760
    %1060 = vmatpush1.msra.mxu0 %v1059
    %1061 = vmatprep.subr.mxu0 0.0
    %v1062 = vand.u32 %v90, 4294901760
    %1063 = vmatpush1.msra.mxu0 %v1062
    %1064 = vmatprep.subr.mxu0 0.0
    %v1065 = vand.u32 %v91, 4294901760
    %1066 = vmatpush1.msra.mxu0 %v1065
    %1067 = vmatprep.subr.mxu0 0.0
    %v1068 = vand.u32 %v92, 4294901760
    %1069 = vmatpush1.msra.mxu0 %v1068
    %1070 = vmatprep.subr.mxu0 0.0
    %v1071 = vand.u32 %v93, 4294901760
    %1072 = vmatpush1.msra.mxu0 %v1071
    %1073 = vmatprep.subr.mxu0 0.0
    %v1074 = vand.u32 %v94, 4294901760
    %1075 = vmatpush1.msra.mxu0 %v1074
    %1076 = vmatprep.subr.mxu0 0.0
    %v1077 = vand.u32 %v95, 4294901760
    %1078 = vmatpush1.msra.mxu0 %v1077
    %1079 = vmatprep.subr.mxu0 0.0
    %v1080 = vand.u32 %v96, 4294901760
    %1081 = vmatpush1.msra.mxu0 %v1080
    %1082 = vmatprep.subr.mxu0 0.0
    %v1083 = vand.u32 %v97, 4294901760
    %1084 = vmatpush1.msra.mxu0 %v1083
    %1085 = vmatprep.subr.mxu0 0.0
    %v1086 = vand.u32 %v98, 4294901760
    %1087 = vmatpush1.msra.mxu0 %v1086
    %1088 = vmatprep.subr.mxu0 0.0
    %v1089 = vand.u32 %v99, 4294901760
    %1090 = vmatpush1.msra.mxu0 %v1089
    %1091 = vmatprep.subr.mxu0 0.0
    %v1092 = vand.u32 %v100, 4294901760
    %1093 = vmatpush1.msra.mxu0 %v1092
    %1094 = vmatprep.subr.mxu0 0.0
    %v1095 = vand.u32 %v101, 4294901760
    %1096 = vmatpush1.msra.mxu0 %v1095
    %1097 = vmatprep.subr.mxu0 0.0
    %v1098 = vand.u32 %v102, 4294901760
    %1099 = vmatpush1.msra.mxu0 %v1098
    %1100 = vmatprep.subr.mxu0 0.0
    %v1101 = vand.u32 %v103, 4294901760
    %1102 = vmatpush1.msra.mxu0 %v1101
    %1103 = vmatprep.subr.mxu0 0.0
    %v1104 = vand.u32 %v104, 4294901760
    %1105 = vmatpush1.msra.mxu0 %v1104
    %1106 = vmatprep.subr.mxu0 0.0
    %v1107 = vand.u32 %v105, 4294901760
    %1108 = vmatpush1.msra.mxu0 %v1107
    %1109 = vmatprep.subr.mxu0 0.0
    %v1110 = vand.u32 %v106, 4294901760
    %1111 = vmatpush1.msra.mxu0 %v1110
    %1112 = vmatprep.subr.mxu0 0.0
    %v1113 = vand.u32 %v107, 4294901760
    %1114 = vmatpush1.msra.mxu0 %v1113
    %1115 = vmatprep.subr.mxu0 0.0
    %v1116 = vand.u32 %v108, 4294901760
    %1117 = vmatpush1.msra.mxu0 %v1116
    %1118 = vmatprep.subr.mxu0 0.0
    %v1119 = vand.u32 %v109, 4294901760
    %1120 = vmatpush1.msra.mxu0 %v1119
    %1121 = vmatprep.subr.mxu0 0.0
    %v1122 = vand.u32 %v110, 4294901760
    %1123 = vmatpush1.msra.mxu0 %v1122
    %1124 = vmatprep.subr.mxu0 0.0
    %v1125 = vand.u32 %v111, 4294901760
    %1126 = vmatpush1.msra.mxu0 %v1125
    %1127 = vmatprep.subr.mxu0 0.0
    %v1128 = vand.u32 %v112, 4294901760
    %1129 = vmatpush1.msra.mxu0 %v1128
    %1130 = vmatprep.subr.mxu0 0.0
    %v1131 = vand.u32 %v113, 4294901760
    %1132 = vmatpush1.msra.mxu0 %v1131
    %1133 = vmatprep.subr.mxu0 0.0
    %v1134 = vand.u32 %v114, 4294901760
    %1135 = vmatpush1.msra.mxu0 %v1134
    %v1136 = vand.u32 %v46, 4294901760
    %v1137 = vsub.f32 %v46, %v1136
    %v1138 = vand.u32 %v1137, 4294901760
    %v1139 = vsub.f32 %v1137, %v1138
    %v1140 = vand.u32 %v1139, 4294901760
    %1141 = vmatprep.mubr.f32.mxu0 %v1140
    %v1142 = vand.u32 %v45, 4294901760
    %v1143 = vsub.f32 %v45, %v1142
    %v1144 = vand.u32 %v1143, 4294901760
    %v1145 = vsub.f32 %v1143, %v1144
    %v1146 = vand.u32 %v1145, 4294901760
    %1147 = vmatmul.mubr.f32.gmra.mrb[0].mxu0 %v1146
    %v1148 = vpop.f32.mrb[0].mxu0
    %v1149 = vadd.f32 %v1030, %v1148
    %v1150 = vpop.f32.mrb[0].mxu0
    %v1151 = vand.u32 %v50, 4294901760
    %v1152 = vsub.f32 %v50, %v1151
    %v1153 = vand.u32 %v1152, 4294901760
    %v1154 = vsub.f32 %v1152, %v1153
    %v1155 = vand.u32 %v1154, 4294901760
    %1156 = vmatprep.mubr.f32.mxu0 %v1155
    %v1157 = vand.u32 %v49, 4294901760
    %v1158 = vsub.f32 %v49, %v1157
    %v1159 = vand.u32 %v1158, 4294901760
    %v1160 = vsub.f32 %v1158, %v1159
    %v1161 = vand.u32 %v1160, 4294901760
    %1162 = vmatmul.mubr.f32.gmra.mrb[0].mxu0 %v1161
    %v1163 = vpop.f32.mrb[0].mxu0
    %v1164 = vadd.f32 %v1037, %v1163
    %v1165 = vpop.f32.mrb[0].mxu0
    %1166 = vdwg.mxu0
    %1167 = vmatprep.subr.mxu0 0.0
    %v1168 = vand.u32 %v83, 4294901760
    %v1169 = vsub.f32 %v83, %v1168
    %v1170 = vand.u32 %v1169, 4294901760
    %v1171 = vsub.f32 %v1169, %v1170
    %v1172 = vand.u32 %v1171, 4294901760
    %1173 = vmatpush1.msra.mxu0 %v1172
    %1174 = vmatprep.subr.mxu0 0.0
    %v1175 = vand.u32 %v84, 4294901760
    %v1176 = vsub.f32 %v84, %v1175
    %v1177 = vand.u32 %v1176, 4294901760
    %v1178 = vsub.f32 %v1176, %v1177
    %v1179 = vand.u32 %v1178, 4294901760
    %1180 = vmatpush1.msra.mxu0 %v1179
    %1181 = vmatprep.subr.mxu0 0.0
    %v1182 = vand.u32 %v85, 4294901760
    %v1183 = vsub.f32 %v85, %v1182
    %v1184 = vand.u32 %v1183, 4294901760
    %v1185 = vsub.f32 %v1183, %v1184
    %v1186 = vand.u32 %v1185, 4294901760
    %1187 = vmatpush1.msra.mxu0 %v1186
    %1188 = vmatprep.subr.mxu0 0.0
    %v1189 = vand.u32 %v86, 4294901760
    %v1190 = vsub.f32 %v86, %v1189
    %v1191 = vand.u32 %v1190, 4294901760
    %v1192 = vsub.f32 %v1190, %v1191
    %v1193 = vand.u32 %v1192, 4294901760
    %1194 = vmatpush1.msra.mxu0 %v1193
    %1195 = vmatprep.subr.mxu0 0.0
    %v1196 = vand.u32 %v87, 4294901760
    %v1197 = vsub.f32 %v87, %v1196
    %v1198 = vand.u32 %v1197, 4294901760
    %v1199 = vsub.f32 %v1197, %v1198
    %v1200 = vand.u32 %v1199, 4294901760
    %1201 = vmatpush1.msra.mxu0 %v1200
    %1202 = vmatprep.subr.mxu0 0.0
    %v1203 = vand.u32 %v88, 4294901760
    %v1204 = vsub.f32 %v88, %v1203
    %v1205 = vand.u32 %v1204, 4294901760
    %v1206 = vsub.f32 %v1204, %v1205
    %v1207 = vand.u32 %v1206, 4294901760
    %1208 = vmatpush1.msra.mxu0 %v1207
    %1209 = vmatprep.subr.mxu0 0.0
    %v1210 = vand.u32 %v89, 4294901760
    %v1211 = vsub.f32 %v89, %v1210
    %v1212 = vand.u32 %v1211, 4294901760
    %v1213 = vsub.f32 %v1211, %v1212
    %v1214 = vand.u32 %v1213, 4294901760
    %1215 = vmatpush1.msra.mxu0 %v1214
    %1216 = vmatprep.subr.mxu0 0.0
    %v1217 = vand.u32 %v90, 4294901760
    %v1218 = vsub.f32 %v90, %v1217
    %v1219 = vand.u32 %v1218, 4294901760
    %v1220 = vsub.f32 %v1218, %v1219
    %v1221 = vand.u32 %v1220, 4294901760
    %1222 = vmatpush1.msra.mxu0 %v1221
    %1223 = vmatprep.subr.mxu0 0.0
    %v1224 = vand.u32 %v91, 4294901760
    %v1225 = vsub.f32 %v91, %v1224
    %v1226 = vand.u32 %v1225, 4294901760
    %v1227 = vsub.f32 %v1225, %v1226
    %v1228 = vand.u32 %v1227, 4294901760
    %1229 = vmatpush1.msra.mxu0 %v1228
    %1230 = vmatprep.subr.mxu0 0.0
    %v1231 = vand.u32 %v92, 4294901760
    %v1232 = vsub.f32 %v92, %v1231
    %v1233 = vand.u32 %v1232, 4294901760
    %v1234 = vsub.f32 %v1232, %v1233
    %v1235 = vand.u32 %v1234, 4294901760
    %1236 = vmatpush1.msra.mxu0 %v1235
    %1237 = vmatprep.subr.mxu0 0.0
    %v1238 = vand.u32 %v93, 4294901760
    %v1239 = vsub.f32 %v93, %v1238
    %v1240 = vand.u32 %v1239, 4294901760
    %v1241 = vsub.f32 %v1239, %v1240
    %v1242 = vand.u32 %v1241, 4294901760
    %1243 = vmatpush1.msra.mxu0 %v1242
    %1244 = vmatprep.subr.mxu0 0.0
    %v1245 = vand.u32 %v94, 4294901760
    %v1246 = vsub.f32 %v94, %v1245
    %v1247 = vand.u32 %v1246, 4294901760
    %v1248 = vsub.f32 %v1246, %v1247
    %v1249 = vand.u32 %v1248, 4294901760
    %1250 = vmatpush1.msra.mxu0 %v1249
    %1251 = vmatprep.subr.mxu0 0.0
    %v1252 = vand.u32 %v95, 4294901760
    %v1253 = vsub.f32 %v95, %v1252
    %v1254 = vand.u32 %v1253, 4294901760
    %v1255 = vsub.f32 %v1253, %v1254
    %v1256 = vand.u32 %v1255, 4294901760
    %1257 = vmatpush1.msra.mxu0 %v1256
    %1258 = vmatprep.subr.mxu0 0.0
    %v1259 = vand.u32 %v96, 4294901760
    %v1260 = vsub.f32 %v96, %v1259
    %v1261 = vand.u32 %v1260, 4294901760
    %v1262 = vsub.f32 %v1260, %v1261
    %v1263 = vand.u32 %v1262, 4294901760
    %1264 = vmatpush1.msra.mxu0 %v1263
    %1265 = vmatprep.subr.mxu0 0.0
    %v1266 = vand.u32 %v97, 4294901760
    %v1267 = vsub.f32 %v97, %v1266
    %v1268 = vand.u32 %v1267, 4294901760
    %v1269 = vsub.f32 %v1267, %v1268
    %v1270 = vand.u32 %v1269, 4294901760
    %1271 = vmatpush1.msra.mxu0 %v1270
    %1272 = vmatprep.subr.mxu0 0.0
    %v1273 = vand.u32 %v98, 4294901760
    %v1274 = vsub.f32 %v98, %v1273
    %v1275 = vand.u32 %v1274, 4294901760
    %v1276 = vsub.f32 %v1274, %v1275
    %v1277 = vand.u32 %v1276, 4294901760
    %1278 = vmatpush1.msra.mxu0 %v1277
    %1279 = vmatprep.subr.mxu0 0.0
    %v1280 = vand.u32 %v99, 4294901760
    %v1281 = vsub.f32 %v99, %v1280
    %v1282 = vand.u32 %v1281, 4294901760
    %v1283 = vsub.f32 %v1281, %v1282
    %v1284 = vand.u32 %v1283, 4294901760
    %1285 = vmatpush1.msra.mxu0 %v1284
    %1286 = vmatprep.subr.mxu0 0.0
    %v1287 = vand.u32 %v100, 4294901760
    %v1288 = vsub.f32 %v100, %v1287
    %v1289 = vand.u32 %v1288, 4294901760
    %v1290 = vsub.f32 %v1288, %v1289
    %v1291 = vand.u32 %v1290, 4294901760
    %1292 = vmatpush1.msra.mxu0 %v1291
    %1293 = vmatprep.subr.mxu0 0.0
    %v1294 = vand.u32 %v101, 4294901760
    %v1295 = vsub.f32 %v101, %v1294
    %v1296 = vand.u32 %v1295, 4294901760
    %v1297 = vsub.f32 %v1295, %v1296
    %v1298 = vand.u32 %v1297, 4294901760
    %1299 = vmatpush1.msra.mxu0 %v1298
    %1300 = vmatprep.subr.mxu0 0.0
    %v1301 = vand.u32 %v102, 4294901760
    %v1302 = vsub.f32 %v102, %v1301
    %v1303 = vand.u32 %v1302, 4294901760
    %v1304 = vsub.f32 %v1302, %v1303
    %v1305 = vand.u32 %v1304, 4294901760
    %1306 = vmatpush1.msra.mxu0 %v1305
    %1307 = vmatprep.subr.mxu0 0.0
    %v1308 = vand.u32 %v103, 4294901760
    %v1309 = vsub.f32 %v103, %v1308
    %v1310 = vand.u32 %v1309, 4294901760
    %v1311 = vsub.f32 %v1309, %v1310
    %v1312 = vand.u32 %v1311, 4294901760
    %1313 = vmatpush1.msra.mxu0 %v1312
    %1314 = vmatprep.subr.mxu0 0.0
    %v1315 = vand.u32 %v104, 4294901760
    %v1316 = vsub.f32 %v104, %v1315
    %v1317 = vand.u32 %v1316, 4294901760
    %v1318 = vsub.f32 %v1316, %v1317
    %v1319 = vand.u32 %v1318, 4294901760
    %1320 = vmatpush1.msra.mxu0 %v1319
    %1321 = vmatprep.subr.mxu0 0.0
    %v1322 = vand.u32 %v105, 4294901760
    %v1323 = vsub.f32 %v105, %v1322
    %v1324 = vand.u32 %v1323, 4294901760
    %v1325 = vsub.f32 %v1323, %v1324
    %v1326 = vand.u32 %v1325, 4294901760
    %1327 = vmatpush1.msra.mxu0 %v1326
    %1328 = vmatprep.subr.mxu0 0.0
    %v1329 = vand.u32 %v106, 4294901760
    %v1330 = vsub.f32 %v106, %v1329
    %v1331 = vand.u32 %v1330, 4294901760
    %v1332 = vsub.f32 %v1330, %v1331
    %v1333 = vand.u32 %v1332, 4294901760
    %1334 = vmatpush1.msra.mxu0 %v1333
    %1335 = vmatprep.subr.mxu0 0.0
    %v1336 = vand.u32 %v107, 4294901760
    %v1337 = vsub.f32 %v107, %v1336
    %v1338 = vand.u32 %v1337, 4294901760
    %v1339 = vsub.f32 %v1337, %v1338
    %v1340 = vand.u32 %v1339, 4294901760
    %1341 = vmatpush1.msra.mxu0 %v1340
    %1342 = vmatprep.subr.mxu0 0.0
    %v1343 = vand.u32 %v108, 4294901760
    %v1344 = vsub.f32 %v108, %v1343
    %v1345 = vand.u32 %v1344, 4294901760
    %v1346 = vsub.f32 %v1344, %v1345
    %v1347 = vand.u32 %v1346, 4294901760
    %1348 = vmatpush1.msra.mxu0 %v1347
    %1349 = vmatprep.subr.mxu0 0.0
    %v1350 = vand.u32 %v109, 4294901760
    %v1351 = vsub.f32 %v109, %v1350
    %v1352 = vand.u32 %v1351, 4294901760
    %v1353 = vsub.f32 %v1351, %v1352
    %v1354 = vand.u32 %v1353, 4294901760
    %1355 = vmatpush1.msra.mxu0 %v1354
    %1356 = vmatprep.subr.mxu0 0.0
    %v1357 = vand.u32 %v110, 4294901760
    %v1358 = vsub.f32 %v110, %v1357
    %v1359 = vand.u32 %v1358, 4294901760
    %v1360 = vsub.f32 %v1358, %v1359
    %v1361 = vand.u32 %v1360, 4294901760
    %1362 = vmatpush1.msra.mxu0 %v1361
    %1363 = vmatprep.subr.mxu0 0.0
    %v1364 = vand.u32 %v111, 4294901760
    %v1365 = vsub.f32 %v111, %v1364
    %v1366 = vand.u32 %v1365, 4294901760
    %v1367 = vsub.f32 %v1365, %v1366
    %v1368 = vand.u32 %v1367, 4294901760
    %1369 = vmatpush1.msra.mxu0 %v1368
    %1370 = vmatprep.subr.mxu0 0.0
    %v1371 = vand.u32 %v112, 4294901760
    %v1372 = vsub.f32 %v112, %v1371
    %v1373 = vand.u32 %v1372, 4294901760
    %v1374 = vsub.f32 %v1372, %v1373
    %v1375 = vand.u32 %v1374, 4294901760
    %1376 = vmatpush1.msra.mxu0 %v1375
    %1377 = vmatprep.subr.mxu0 0.0
    %v1378 = vand.u32 %v113, 4294901760
    %v1379 = vsub.f32 %v113, %v1378
    %v1380 = vand.u32 %v1379, 4294901760
    %v1381 = vsub.f32 %v1379, %v1380
    %v1382 = vand.u32 %v1381, 4294901760
    %1383 = vmatpush1.msra.mxu0 %v1382
    %1384 = vmatprep.subr.mxu0 0.0
    %v1385 = vand.u32 %v114, 4294901760
    %v1386 = vsub.f32 %v114, %v1385
    %v1387 = vand.u32 %v1386, 4294901760
    %v1388 = vsub.f32 %v1386, %v1387
    %v1389 = vand.u32 %v1388, 4294901760
    %1390 = vmatpush1.msra.mxu0 %v1389
    %v1391 = vand.u32 %v46, 4294901760
    %1392 = vmatprep.mubr.f32.mxu0 %v1391
    %v1393 = vand.u32 %v45, 4294901760
    %1394 = vmatmul.mubr.f32.gmra.mrb[0].mxu0 %v1393
    %v1395 = vpop.f32.mrb[0].mxu0
    %v1396 = vadd.f32 %v1149, %v1395
    %v1397 = vpop.f32.mrb[0].mxu0
    %v1398 = vand.u32 %v50, 4294901760
    %1399 = vmatprep.mubr.f32.mxu0 %v1398
    %v1400 = vand.u32 %v49, 4294901760
    %1401 = vmatmul.mubr.f32.gmra.mrb[0].mxu0 %v1400
    %v1402 = vpop.f32.mrb[0].mxu0
    %v1403 = vadd.f32 %v1164, %v1402
    %v1404 = vpop.f32.mrb[0].mxu0
    %1405 = vdwg.mxu0
    %1406 = vmatprep.subr.mxu0 0.0
    %v1407 = vand.u32 %v83, 4294901760
    %v1408 = vsub.f32 %v83, %v1407
    %1409 = vmatpush1.msra.mxu0 %v1408
    %1410 = vmatprep.subr.mxu0 0.0
    %v1411 = vand.u32 %v84, 4294901760
    %v1412 = vsub.f32 %v84, %v1411
    %1413 = vmatpush1.msra.mxu0 %v1412
    %1414 = vmatprep.subr.mxu0 0.0
    %v1415 = vand.u32 %v85, 4294901760
    %v1416 = vsub.f32 %v85, %v1415
    %1417 = vmatpush1.msra.mxu0 %v1416
    %1418 = vmatprep.subr.mxu0 0.0
    %v1419 = vand.u32 %v86, 4294901760
    %v1420 = vsub.f32 %v86, %v1419
    %1421 = vmatpush1.msra.mxu0 %v1420
    %1422 = vmatprep.subr.mxu0 0.0
    %v1423 = vand.u32 %v87, 4294901760
    %v1424 = vsub.f32 %v87, %v1423
    %1425 = vmatpush1.msra.mxu0 %v1424
    %1426 = vmatprep.subr.mxu0 0.0
    %v1427 = vand.u32 %v88, 4294901760
    %v1428 = vsub.f32 %v88, %v1427
    %1429 = vmatpush1.msra.mxu0 %v1428
    %1430 = vmatprep.subr.mxu0 0.0
    %v1431 = vand.u32 %v89, 4294901760
    %v1432 = vsub.f32 %v89, %v1431
    %1433 = vmatpush1.msra.mxu0 %v1432
    %1434 = vmatprep.subr.mxu0 0.0
    %v1435 = vand.u32 %v90, 4294901760
    %v1436 = vsub.f32 %v90, %v1435
    %1437 = vmatpush1.msra.mxu0 %v1436
    %1438 = vmatprep.subr.mxu0 0.0
    %v1439 = vand.u32 %v91, 4294901760
    %v1440 = vsub.f32 %v91, %v1439
    %1441 = vmatpush1.msra.mxu0 %v1440
    %1442 = vmatprep.subr.mxu0 0.0
    %v1443 = vand.u32 %v92, 4294901760
    %v1444 = vsub.f32 %v92, %v1443
    %1445 = vmatpush1.msra.mxu0 %v1444
    %1446 = vmatprep.subr.mxu0 0.0
    %v1447 = vand.u32 %v93, 4294901760
    %v1448 = vsub.f32 %v93, %v1447
    %1449 = vmatpush1.msra.mxu0 %v1448
    %1450 = vmatprep.subr.mxu0 0.0
    %v1451 = vand.u32 %v94, 4294901760
    %v1452 = vsub.f32 %v94, %v1451
    %1453 = vmatpush1.msra.mxu0 %v1452
    %1454 = vmatprep.subr.mxu0 0.0
    %v1455 = vand.u32 %v95, 4294901760
    %v1456 = vsub.f32 %v95, %v1455
    %1457 = vmatpush1.msra.mxu0 %v1456
    %1458 = vmatprep.subr.mxu0 0.0
    %v1459 = vand.u32 %v96, 4294901760
    %v1460 = vsub.f32 %v96, %v1459
    %1461 = vmatpush1.msra.mxu0 %v1460
    %1462 = vmatprep.subr.mxu0 0.0
    %v1463 = vand.u32 %v97, 4294901760
    %v1464 = vsub.f32 %v97, %v1463
    %1465 = vmatpush1.msra.mxu0 %v1464
    %1466 = vmatprep.subr.mxu0 0.0
    %v1467 = vand.u32 %v98, 4294901760
    %v1468 = vsub.f32 %v98, %v1467
    %1469 = vmatpush1.msra.mxu0 %v1468
    %1470 = vmatprep.subr.mxu0 0.0
    %v1471 = vand.u32 %v99, 4294901760
    %v1472 = vsub.f32 %v99, %v1471
    %1473 = vmatpush1.msra.mxu0 %v1472
    %1474 = vmatprep.subr.mxu0 0.0
    %v1475 = vand.u32 %v100, 4294901760
    %v1476 = vsub.f32 %v100, %v1475
    %1477 = vmatpush1.msra.mxu0 %v1476
    %1478 = vmatprep.subr.mxu0 0.0
    %v1479 = vand.u32 %v101, 4294901760
    %v1480 = vsub.f32 %v101, %v1479
    %1481 = vmatpush1.msra.mxu0 %v1480
    %1482 = vmatprep.subr.mxu0 0.0
    %v1483 = vand.u32 %v102, 4294901760
    %v1484 = vsub.f32 %v102, %v1483
    %1485 = vmatpush1.msra.mxu0 %v1484
    %1486 = vmatprep.subr.mxu0 0.0
    %v1487 = vand.u32 %v103, 4294901760
    %v1488 = vsub.f32 %v103, %v1487
    %1489 = vmatpush1.msra.mxu0 %v1488
    %1490 = vmatprep.subr.mxu0 0.0
    %v1491 = vand.u32 %v104, 4294901760
    %v1492 = vsub.f32 %v104, %v1491
    %1493 = vmatpush1.msra.mxu0 %v1492
    %1494 = vmatprep.subr.mxu0 0.0
    %v1495 = vand.u32 %v105, 4294901760
    %v1496 = vsub.f32 %v105, %v1495
    %1497 = vmatpush1.msra.mxu0 %v1496
    %1498 = vmatprep.subr.mxu0 0.0
    %v1499 = vand.u32 %v106, 4294901760
    %v1500 = vsub.f32 %v106, %v1499
    %1501 = vmatpush1.msra.mxu0 %v1500
    %1502 = vmatprep.subr.mxu0 0.0
    %v1503 = vand.u32 %v107, 4294901760
    %v1504 = vsub.f32 %v107, %v1503
    %1505 = vmatpush1.msra.mxu0 %v1504
    %1506 = vmatprep.subr.mxu0 0.0
    %v1507 = vand.u32 %v108, 4294901760
    %v1508 = vsub.f32 %v108, %v1507
    %1509 = vmatpush1.msra.mxu0 %v1508
    %1510 = vmatprep.subr.mxu0 0.0
    %v1511 = vand.u32 %v109, 4294901760
    %v1512 = vsub.f32 %v109, %v1511
    %1513 = vmatpush1.msra.mxu0 %v1512
    %1514 = vmatprep.subr.mxu0 0.0
    %v1515 = vand.u32 %v110, 4294901760
    %v1516 = vsub.f32 %v110, %v1515
    %1517 = vmatpush1.msra.mxu0 %v1516
    %1518 = vmatprep.subr.mxu0 0.0
    %v1519 = vand.u32 %v111, 4294901760
    %v1520 = vsub.f32 %v111, %v1519
    %1521 = vmatpush1.msra.mxu0 %v1520
    %1522 = vmatprep.subr.mxu0 0.0
    %v1523 = vand.u32 %v112, 4294901760
    %v1524 = vsub.f32 %v112, %v1523
    %1525 = vmatpush1.msra.mxu0 %v1524
    %1526 = vmatprep.subr.mxu0 0.0
    %v1527 = vand.u32 %v113, 4294901760
    %v1528 = vsub.f32 %v113, %v1527
    %1529 = vmatpush1.msra.mxu0 %v1528
    %1530 = vmatprep.subr.mxu0 0.0
    %v1531 = vand.u32 %v114, 4294901760
    %v1532 = vsub.f32 %v114, %v1531
    %1533 = vmatpush1.msra.mxu0 %v1532
    %v1534 = vand.u32 %v46, 4294901760
    %v1535 = vsub.f32 %v46, %v1534
    %1536 = vmatprep.mubr.f32.mxu0 %v1535
    %v1537 = vand.u32 %v45, 4294901760
    %v1538 = vsub.f32 %v45, %v1537
    %1539 = vmatmul.mubr.f32.gmra.mrb[0].mxu0 %v1538
    %v1540 = vpop.f32.mrb[0].mxu0
    %v1541 = vadd.f32 %v1396, %v1540
    %v1542 = vpop.f32.mrb[0].mxu0
    %v1543 = vand.u32 %v50, 4294901760
    %v1544 = vsub.f32 %v50, %v1543
    %1545 = vmatprep.mubr.f32.mxu0 %v1544
    %v1546 = vand.u32 %v49, 4294901760
    %v1547 = vsub.f32 %v49, %v1546
    %1548 = vmatmul.mubr.f32.gmra.mrb[0].mxu0 %v1547
    %v1549 = vpop.f32.mrb[0].mxu0
    %v1550 = vadd.f32 %v1403, %v1549
    %v1551 = vpop.f32.mrb[0].mxu0
    %1552 = vdwg.mxu0
    %1553 = vmatprep.subr.mxu0 0.0
    %v1554 = vand.u32 %v83, 4294901760
    %1555 = vmatpush1.msra.mxu0 %v1554
    %1556 = vmatprep.subr.mxu0 0.0
    %v1557 = vand.u32 %v84, 4294901760
    %1558 = vmatpush1.msra.mxu0 %v1557
    %1559 = vmatprep.subr.mxu0 0.0
    %v1560 = vand.u32 %v85, 4294901760
    %1561 = vmatpush1.msra.mxu0 %v1560
    %1562 = vmatprep.subr.mxu0 0.0
    %v1563 = vand.u32 %v86, 4294901760
    %1564 = vmatpush1.msra.mxu0 %v1563
    %1565 = vmatprep.subr.mxu0 0.0
    %v1566 = vand.u32 %v87, 4294901760
    %1567 = vmatpush1.msra.mxu0 %v1566
    %1568 = vmatprep.subr.mxu0 0.0
    %v1569 = vand.u32 %v88, 4294901760
    %1570 = vmatpush1.msra.mxu0 %v1569
    %1571 = vmatprep.subr.mxu0 0.0
    %v1572 = vand.u32 %v89, 4294901760
    %1573 = vmatpush1.msra.mxu0 %v1572
    %1574 = vmatprep.subr.mxu0 0.0
    %v1575 = vand.u32 %v90, 4294901760
    %1576 = vmatpush1.msra.mxu0 %v1575
    %1577 = vmatprep.subr.mxu0 0.0
    %v1578 = vand.u32 %v91, 4294901760
    %1579 = vmatpush1.msra.mxu0 %v1578
    %1580 = vmatprep.subr.mxu0 0.0
    %v1581 = vand.u32 %v92, 4294901760
    %1582 = vmatpush1.msra.mxu0 %v1581
    %1583 = vmatprep.subr.mxu0 0.0
    %v1584 = vand.u32 %v93, 4294901760
    %1585 = vmatpush1.msra.mxu0 %v1584
    %1586 = vmatprep.subr.mxu0 0.0
    %v1587 = vand.u32 %v94, 4294901760
    %1588 = vmatpush1.msra.mxu0 %v1587
    %1589 = vmatprep.subr.mxu0 0.0
    %v1590 = vand.u32 %v95, 4294901760
    %1591 = vmatpush1.msra.mxu0 %v1590
    %1592 = vmatprep.subr.mxu0 0.0
    %v1593 = vand.u32 %v96, 4294901760
    %1594 = vmatpush1.msra.mxu0 %v1593
    %1595 = vmatprep.subr.mxu0 0.0
    %v1596 = vand.u32 %v97, 4294901760
    %1597 = vmatpush1.msra.mxu0 %v1596
    %1598 = vmatprep.subr.mxu0 0.0
    %v1599 = vand.u32 %v98, 4294901760
    %1600 = vmatpush1.msra.mxu0 %v1599
    %1601 = vmatprep.subr.mxu0 0.0
    %v1602 = vand.u32 %v99, 4294901760
    %1603 = vmatpush1.msra.mxu0 %v1602
    %1604 = vmatprep.subr.mxu0 0.0
    %v1605 = vand.u32 %v100, 4294901760
    %1606 = vmatpush1.msra.mxu0 %v1605
    %1607 = vmatprep.subr.mxu0 0.0
    %v1608 = vand.u32 %v101, 4294901760
    %1609 = vmatpush1.msra.mxu0 %v1608
    %1610 = vmatprep.subr.mxu0 0.0
    %v1611 = vand.u32 %v102, 4294901760
    %1612 = vmatpush1.msra.mxu0 %v1611
    %1613 = vmatprep.subr.mxu0 0.0
    %v1614 = vand.u32 %v103, 4294901760
    %1615 = vmatpush1.msra.mxu0 %v1614
    %1616 = vmatprep.subr.mxu0 0.0
    %v1617 = vand.u32 %v104, 4294901760
    %1618 = vmatpush1.msra.mxu0 %v1617
    %1619 = vmatprep.subr.mxu0 0.0
    %v1620 = vand.u32 %v105, 4294901760
    %1621 = vmatpush1.msra.mxu0 %v1620
    %1622 = vmatprep.subr.mxu0 0.0
    %v1623 = vand.u32 %v106, 4294901760
    %1624 = vmatpush1.msra.mxu0 %v1623
    %1625 = vmatprep.subr.mxu0 0.0
    %v1626 = vand.u32 %v107, 4294901760
    %1627 = vmatpush1.msra.mxu0 %v1626
    %1628 = vmatprep.subr.mxu0 0.0
    %v1629 = vand.u32 %v108, 4294901760
    %1630 = vmatpush1.msra.mxu0 %v1629
    %1631 = vmatprep.subr.mxu0 0.0
    %v1632 = vand.u32 %v109, 4294901760
    %1633 = vmatpush1.msra.mxu0 %v1632
    %1634 = vmatprep.subr.mxu0 0.0
    %v1635 = vand.u32 %v110, 4294901760
    %1636 = vmatpush1.msra.mxu0 %v1635
    %1637 = vmatprep.subr.mxu0 0.0
    %v1638 = vand.u32 %v111, 4294901760
    %1639 = vmatpush1.msra.mxu0 %v1638
    %1640 = vmatprep.subr.mxu0 0.0
    %v1641 = vand.u32 %v112, 4294901760
    %1642 = vmatpush1.msra.mxu0 %v1641
    %1643 = vmatprep.subr.mxu0 0.0
    %v1644 = vand.u32 %v113, 4294901760
    %1645 = vmatpush1.msra.mxu0 %v1644
    %1646 = vmatprep.subr.mxu0 0.0
    %v1647 = vand.u32 %v114, 4294901760
    %1648 = vmatpush1.msra.mxu0 %v1647
    %v1649 = vand.u32 %v46, 4294901760
    %v1650 = vsub.f32 %v46, %v1649
    %v1651 = vand.u32 %v1650, 4294901760
    %1652 = vmatprep.mubr.f32.mxu0 %v1651
    %v1653 = vand.u32 %v45, 4294901760
    %v1654 = vsub.f32 %v45, %v1653
    %v1655 = vand.u32 %v1654, 4294901760
    %1656 = vmatmul.mubr.f32.gmra.mrb[0].mxu0 %v1655
    %v1657 = vpop.f32.mrb[0].mxu0
    %v1658 = vadd.f32 %v1541, %v1657
    %v1659 = vpop.f32.mrb[0].mxu0
    %v1660 = vand.u32 %v50, 4294901760
    %v1661 = vsub.f32 %v50, %v1660
    %v1662 = vand.u32 %v1661, 4294901760
    %1663 = vmatprep.mubr.f32.mxu0 %v1662
    %v1664 = vand.u32 %v49, 4294901760
    %v1665 = vsub.f32 %v49, %v1664
    %v1666 = vand.u32 %v1665, 4294901760
    %1667 = vmatmul.mubr.f32.gmra.mrb[0].mxu0 %v1666
    %v1668 = vpop.f32.mrb[0].mxu0
    %v1669 = vadd.f32 %v1550, %v1668
    %v1670 = vpop.f32.mrb[0].mxu0
    %1671 = vdwg.mxu0
    %1672 = vmatprep.subr.mxu0 0.0
    %v1673 = vand.u32 %v83, 4294901760
    %v1674 = vsub.f32 %v83, %v1673
    %v1675 = vand.u32 %v1674, 4294901760
    %1676 = vmatpush1.msra.mxu0 %v1675
    %1677 = vmatprep.subr.mxu0 0.0
    %v1678 = vand.u32 %v84, 4294901760
    %v1679 = vsub.f32 %v84, %v1678
    %v1680 = vand.u32 %v1679, 4294901760
    %1681 = vmatpush1.msra.mxu0 %v1680
    %1682 = vmatprep.subr.mxu0 0.0
    %v1683 = vand.u32 %v85, 4294901760
    %v1684 = vsub.f32 %v85, %v1683
    %v1685 = vand.u32 %v1684, 4294901760
    %1686 = vmatpush1.msra.mxu0 %v1685
    %1687 = vmatprep.subr.mxu0 0.0
    %v1688 = vand.u32 %v86, 4294901760
    %v1689 = vsub.f32 %v86, %v1688
    %v1690 = vand.u32 %v1689, 4294901760
    %1691 = vmatpush1.msra.mxu0 %v1690
    %1692 = vmatprep.subr.mxu0 0.0
    %v1693 = vand.u32 %v87, 4294901760
    %v1694 = vsub.f32 %v87, %v1693
    %v1695 = vand.u32 %v1694, 4294901760
    %1696 = vmatpush1.msra.mxu0 %v1695
    %1697 = vmatprep.subr.mxu0 0.0
    %v1698 = vand.u32 %v88, 4294901760
    %v1699 = vsub.f32 %v88, %v1698
    %v1700 = vand.u32 %v1699, 4294901760
    %1701 = vmatpush1.msra.mxu0 %v1700
    %1702 = vmatprep.subr.mxu0 0.0
    %v1703 = vand.u32 %v89, 4294901760
    %v1704 = vsub.f32 %v89, %v1703
    %v1705 = vand.u32 %v1704, 4294901760
    %1706 = vmatpush1.msra.mxu0 %v1705
    %1707 = vmatprep.subr.mxu0 0.0
    %v1708 = vand.u32 %v90, 4294901760
    %v1709 = vsub.f32 %v90, %v1708
    %v1710 = vand.u32 %v1709, 4294901760
    %1711 = vmatpush1.msra.mxu0 %v1710
    %1712 = vmatprep.subr.mxu0 0.0
    %v1713 = vand.u32 %v91, 4294901760
    %v1714 = vsub.f32 %v91, %v1713
    %v1715 = vand.u32 %v1714, 4294901760
    %1716 = vmatpush1.msra.mxu0 %v1715
    %1717 = vmatprep.subr.mxu0 0.0
    %v1718 = vand.u32 %v92, 4294901760
    %v1719 = vsub.f32 %v92, %v1718
    %v1720 = vand.u32 %v1719, 4294901760
    %1721 = vmatpush1.msra.mxu0 %v1720
    %1722 = vmatprep.subr.mxu0 0.0
    %v1723 = vand.u32 %v93, 4294901760
    %v1724 = vsub.f32 %v93, %v1723
    %v1725 = vand.u32 %v1724, 4294901760
    %1726 = vmatpush1.msra.mxu0 %v1725
    %1727 = vmatprep.subr.mxu0 0.0
    %v1728 = vand.u32 %v94, 4294901760
    %v1729 = vsub.f32 %v94, %v1728
    %v1730 = vand.u32 %v1729, 4294901760
    %1731 = vmatpush1.msra.mxu0 %v1730
    %1732 = vmatprep.subr.mxu0 0.0
    %v1733 = vand.u32 %v95, 4294901760
    %v1734 = vsub.f32 %v95, %v1733
    %v1735 = vand.u32 %v1734, 4294901760
    %1736 = vmatpush1.msra.mxu0 %v1735
    %1737 = vmatprep.subr.mxu0 0.0
    %v1738 = vand.u32 %v96, 4294901760
    %v1739 = vsub.f32 %v96, %v1738
    %v1740 = vand.u32 %v1739, 4294901760
    %1741 = vmatpush1.msra.mxu0 %v1740
    %1742 = vmatprep.subr.mxu0 0.0
    %v1743 = vand.u32 %v97, 4294901760
    %v1744 = vsub.f32 %v97, %v1743
    %v1745 = vand.u32 %v1744, 4294901760
    %1746 = vmatpush1.msra.mxu0 %v1745
    %1747 = vmatprep.subr.mxu0 0.0
    %v1748 = vand.u32 %v98, 4294901760
    %v1749 = vsub.f32 %v98, %v1748
    %v1750 = vand.u32 %v1749, 4294901760
    %1751 = vmatpush1.msra.mxu0 %v1750
    %1752 = vmatprep.subr.mxu0 0.0
    %v1753 = vand.u32 %v99, 4294901760
    %v1754 = vsub.f32 %v99, %v1753
    %v1755 = vand.u32 %v1754, 4294901760
    %1756 = vmatpush1.msra.mxu0 %v1755
    %1757 = vmatprep.subr.mxu0 0.0
    %v1758 = vand.u32 %v100, 4294901760
    %v1759 = vsub.f32 %v100, %v1758
    %v1760 = vand.u32 %v1759, 4294901760
    %1761 = vmatpush1.msra.mxu0 %v1760
    %1762 = vmatprep.subr.mxu0 0.0
    %v1763 = vand.u32 %v101, 4294901760
    %v1764 = vsub.f32 %v101, %v1763
    %v1765 = vand.u32 %v1764, 4294901760
    %1766 = vmatpush1.msra.mxu0 %v1765
    %1767 = vmatprep.subr.mxu0 0.0
    %v1768 = vand.u32 %v102, 4294901760
    %v1769 = vsub.f32 %v102, %v1768
    %v1770 = vand.u32 %v1769, 4294901760
    %1771 = vmatpush1.msra.mxu0 %v1770
    %1772 = vmatprep.subr.mxu0 0.0
    %v1773 = vand.u32 %v103, 4294901760
    %v1774 = vsub.f32 %v103, %v1773
    %v1775 = vand.u32 %v1774, 4294901760
    %1776 = vmatpush1.msra.mxu0 %v1775
    %1777 = vmatprep.subr.mxu0 0.0
    %v1778 = vand.u32 %v104, 4294901760
    %v1779 = vsub.f32 %v104, %v1778
    %v1780 = vand.u32 %v1779, 4294901760
    %1781 = vmatpush1.msra.mxu0 %v1780
    %1782 = vmatprep.subr.mxu0 0.0
    %v1783 = vand.u32 %v105, 4294901760
    %v1784 = vsub.f32 %v105, %v1783
    %v1785 = vand.u32 %v1784, 4294901760
    %1786 = vmatpush1.msra.mxu0 %v1785
    %1787 = vmatprep.subr.mxu0 0.0
    %v1788 = vand.u32 %v106, 4294901760
    %v1789 = vsub.f32 %v106, %v1788
    %v1790 = vand.u32 %v1789, 4294901760
    %1791 = vmatpush1.msra.mxu0 %v1790
    %1792 = vmatprep.subr.mxu0 0.0
    %v1793 = vand.u32 %v107, 4294901760
    %v1794 = vsub.f32 %v107, %v1793
    %v1795 = vand.u32 %v1794, 4294901760
    %1796 = vmatpush1.msra.mxu0 %v1795
    %1797 = vmatprep.subr.mxu0 0.0
    %v1798 = vand.u32 %v108, 4294901760
    %v1799 = vsub.f32 %v108, %v1798
    %v1800 = vand.u32 %v1799, 4294901760
    %1801 = vmatpush1.msra.mxu0 %v1800
    %1802 = vmatprep.subr.mxu0 0.0
    %v1803 = vand.u32 %v109, 4294901760
    %v1804 = vsub.f32 %v109, %v1803
    %v1805 = vand.u32 %v1804, 4294901760
    %1806 = vmatpush1.msra.mxu0 %v1805
    %1807 = vmatprep.subr.mxu0 0.0
    %v1808 = vand.u32 %v110, 4294901760
    %v1809 = vsub.f32 %v110, %v1808
    %v1810 = vand.u32 %v1809, 4294901760
    %1811 = vmatpush1.msra.mxu0 %v1810
    %1812 = vmatprep.subr.mxu0 0.0
    %v1813 = vand.u32 %v111, 4294901760
    %v1814 = vsub.f32 %v111, %v1813
    %v1815 = vand.u32 %v1814, 4294901760
    %1816 = vmatpush1.msra.mxu0 %v1815
    %1817 = vmatprep.subr.mxu0 0.0
    %v1818 = vand.u32 %v112, 4294901760
    %v1819 = vsub.f32 %v112, %v1818
    %v1820 = vand.u32 %v1819, 4294901760
    %1821 = vmatpush1.msra.mxu0 %v1820
    %1822 = vmatprep.subr.mxu0 0.0
    %v1823 = vand.u32 %v113, 4294901760
    %v1824 = vsub.f32 %v113, %v1823
    %v1825 = vand.u32 %v1824, 4294901760
    %1826 = vmatpush1.msra.mxu0 %v1825
    %1827 = vmatprep.subr.mxu0 0.0
    %v1828 = vand.u32 %v114, 4294901760
    %v1829 = vsub.f32 %v114, %v1828
    %v1830 = vand.u32 %v1829, 4294901760
    %1831 = vmatpush1.msra.mxu0 %v1830
    %v1832 = vand.u32 %v46, 4294901760
    %1833 = vmatprep.mubr.f32.mxu0 %v1832
    %v1834 = vand.u32 %v45, 4294901760
    %1835 = vmatmul.mubr.f32.gmra.mrb[0].mxu0 %v1834
    %v1836 = vpop.f32.mrb[0].mxu0
    %v1837 = vadd.f32 %v1658, %v1836
    %v1838 = vpop.f32.mrb[0].mxu0
    %v1839 = vand.u32 %v50, 4294901760
    %1840 = vmatprep.mubr.f32.mxu0 %v1839
    %v1841 = vand.u32 %v49, 4294901760
    %1842 = vmatmul.mubr.f32.gmra.mrb[0].mxu0 %v1841
    %v1843 = vpop.f32.mrb[0].mxu0
    %v1844 = vadd.f32 %v1669, %v1843
    %v1845 = vpop.f32.mrb[0].mxu0
    %1846 = vdwg.mxu0
    %1847 = vmatprep.subr.mxu0 0.0
    %v1848 = vand.u32 %v83, 4294901760
    %1849 = vmatpush1.msra.mxu0 %v1848
    %1850 = vmatprep.subr.mxu0 0.0
    %v1851 = vand.u32 %v84, 4294901760
    %1852 = vmatpush1.msra.mxu0 %v1851
    %1853 = vmatprep.subr.mxu0 0.0
    %v1854 = vand.u32 %v85, 4294901760
    %1855 = vmatpush1.msra.mxu0 %v1854
    %1856 = vmatprep.subr.mxu0 0.0
    %v1857 = vand.u32 %v86, 4294901760
    %1858 = vmatpush1.msra.mxu0 %v1857
    %1859 = vmatprep.subr.mxu0 0.0
    %v1860 = vand.u32 %v87, 4294901760
    %1861 = vmatpush1.msra.mxu0 %v1860
    %1862 = vmatprep.subr.mxu0 0.0
    %v1863 = vand.u32 %v88, 4294901760
    %1864 = vmatpush1.msra.mxu0 %v1863
    %1865 = vmatprep.subr.mxu0 0.0
    %v1866 = vand.u32 %v89, 4294901760
    %1867 = vmatpush1.msra.mxu0 %v1866
    %1868 = vmatprep.subr.mxu0 0.0
    %v1869 = vand.u32 %v90, 4294901760
    %1870 = vmatpush1.msra.mxu0 %v1869
    %1871 = vmatprep.subr.mxu0 0.0
    %v1872 = vand.u32 %v91, 4294901760
    %1873 = vmatpush1.msra.mxu0 %v1872
    %1874 = vmatprep.subr.mxu0 0.0
    %v1875 = vand.u32 %v92, 4294901760
    %1876 = vmatpush1.msra.mxu0 %v1875
    %1877 = vmatprep.subr.mxu0 0.0
    %v1878 = vand.u32 %v93, 4294901760
    %1879 = vmatpush1.msra.mxu0 %v1878
    %1880 = vmatprep.subr.mxu0 0.0
    %v1881 = vand.u32 %v94, 4294901760
    %1882 = vmatpush1.msra.mxu0 %v1881
    %1883 = vmatprep.subr.mxu0 0.0
    %v1884 = vand.u32 %v95, 4294901760
    %1885 = vmatpush1.msra.mxu0 %v1884
    %1886 = vmatprep.subr.mxu0 0.0
    %v1887 = vand.u32 %v96, 4294901760
    %1888 = vmatpush1.msra.mxu0 %v1887
    %1889 = vmatprep.subr.mxu0 0.0
    %v1890 = vand.u32 %v97, 4294901760
    %1891 = vmatpush1.msra.mxu0 %v1890
    %1892 = vmatprep.subr.mxu0 0.0
    %v1893 = vand.u32 %v98, 4294901760
    %1894 = vmatpush1.msra.mxu0 %v1893
    %1895 = vmatprep.subr.mxu0 0.0
    %v1896 = vand.u32 %v99, 4294901760
    %1897 = vmatpush1.msra.mxu0 %v1896
    %1898 = vmatprep.subr.mxu0 0.0
    %v1899 = vand.u32 %v100, 4294901760
    %1900 = vmatpush1.msra.mxu0 %v1899
    %1901 = vmatprep.subr.mxu0 0.0
    %v1902 = vand.u32 %v101, 4294901760
    %1903 = vmatpush1.msra.mxu0 %v1902
    %1904 = vmatprep.subr.mxu0 0.0
    %v1905 = vand.u32 %v102, 4294901760
    %1906 = vmatpush1.msra.mxu0 %v1905
    %1907 = vmatprep.subr.mxu0 0.0
    %v1908 = vand.u32 %v103, 4294901760
    %1909 = vmatpush1.msra.mxu0 %v1908
    %1910 = vmatprep.subr.mxu0 0.0
    %v1911 = vand.u32 %v104, 4294901760
    %1912 = vmatpush1.msra.mxu0 %v1911
    %1913 = vmatprep.subr.mxu0 0.0
    %v1914 = vand.u32 %v105, 4294901760
    %1915 = vmatpush1.msra.mxu0 %v1914
    %1916 = vmatprep.subr.mxu0 0.0
    %v1917 = vand.u32 %v106, 4294901760
    %1918 = vmatpush1.msra.mxu0 %v1917
    %1919 = vmatprep.subr.mxu0 0.0
    %v1920 = vand.u32 %v107, 4294901760
    %1921 = vmatpush1.msra.mxu0 %v1920
    %1922 = vmatprep.subr.mxu0 0.0
    %v1923 = vand.u32 %v108, 4294901760
    %1924 = vmatpush1.msra.mxu0 %v1923
    %1925 = vmatprep.subr.mxu0 0.0
    %v1926 = vand.u32 %v109, 4294901760
    %1927 = vmatpush1.msra.mxu0 %v1926
    %1928 = vmatprep.subr.mxu0 0.0
    %v1929 = vand.u32 %v110, 4294901760
    %1930 = vmatpush1.msra.mxu0 %v1929
    %1931 = vmatprep.subr.mxu0 0.0
    %v1932 = vand.u32 %v111, 4294901760
    %1933 = vmatpush1.msra.mxu0 %v1932
    %1934 = vmatprep.subr.mxu0 0.0
    %v1935 = vand.u32 %v112, 4294901760
    %1936 = vmatpush1.msra.mxu0 %v1935
    %1937 = vmatprep.subr.mxu0 0.0
    %v1938 = vand.u32 %v113, 4294901760
    %1939 = vmatpush1.msra.mxu0 %v1938
    %1940 = vmatprep.subr.mxu0 0.0
    %v1941 = vand.u32 %v114, 4294901760
    %1942 = vmatpush1.msra.mxu0 %v1941
    %v1943 = vand.u32 %v46, 4294901760
    %1944 = vmatprep.mubr.f32.mxu0 %v1943
    %v1945 = vand.u32 %v45, 4294901760
    %1946 = vmatmul.mubr.f32.gmra.mrb[0].mxu0 %v1945
    %v1947 = vpop.f32.mrb[0].mxu0
    %v1948 = vadd.f32 %v1837, %v1947
    %v1949 = vpop.f32.mrb[0].mxu0
    %v1950 = vand.u32 %v50, 4294901760
    %1951 = vmatprep.mubr.f32.mxu0 %v1950
    %v1952 = vand.u32 %v49, 4294901760
    %1953 = vmatmul.mubr.f32.gmra.mrb[0].mxu0 %v1952
    %v1954 = vpop.f32.mrb[0].mxu0
    %v1955 = vadd.f32 %v1844, %v1954
    %v1956 = vpop.f32.mrb[0].mxu0
    %1957 = vdwg.mxu0
    %1958 = vst [vmem:[#allocation7] sm:$0xff] %v1948
    %1959 = vst [vmem:[#allocation7 + $0x8] sm:$0xff] %v1955
    // Predicated region
    $region22: #{tpu_custom_call.1} parent=1 // pred_check
      _
    $region23: #{tpu_custom_call.1} parent=1 // pred_check_branch
      %1961 = sbr.rel (0) target = $region25
    $region24: #{tpu_custom_call.1} parent=1 // pred_region
      %s1963 = ssub.s32 256, 256
      %1964 = vsyncadd [#allocation4], %s1963
      %s1965 = sshll.u32 [#allocation7], 4
      %s1966 = int_to_ptr.vmem [resolvable:$true] %s1965
      %1971 = dma.vmem_to_hbm [thread:$0]  %s1966, 256, %s3, [#allocation4], 128, 128, 8
    $region25: #{tpu_custom_call.1} parent=1 // pred_fallthru
      _
    // Predicated region
    $region26: #{tpu_custom_call.1} parent=1 // pred_check
      _
    $region27: #{tpu_custom_call.1} parent=1 // pred_check_branch
      %1973 = sbr.rel (0) target = $region29
    $region28: #{tpu_custom_call.1} parent=1 // pred_region
      %1974 = dma.done [#allocation4], 256
    $region29: #{tpu_custom_call.1} parent=1 // pred_fallthru
      _
    %1975 = vsyncpa [#allocation3], 1
    %1976 = vsyncpa [#allocation6], 1
    %1977 = vsyncpa [#allocation4], 1

</llo_original>
